<compile_context>
chip_gen: v7x
topology: tpu7x:2x2x1
jax: 0.10.0
libtpu: 0.0.40
codegen_flags: <defaults>
</compile_context>

<pallas_src>
import functools

import jax
import jax.numpy as jnp
from jax import lax
from jax.experimental import pallas as pl
from jax.experimental.pallas import tpu as pltpu


def _conv_block_kernel(shortcut, R, Wr, nb, *refs):
    """One (batch, row-band) tile per grid step.

    Layouts (channels on sublanes, strided flat spatial on lanes; Wr = Wp + 1
    with one zero 'gap' lane per row acting as the conv left/right zero pad):
      x_ref  : (Cin, (R+4)*Wr + 2)  band rows rb0-2 .. rb0+R+1, 1 zero lane on
                                    each side (bf16)
      w1_ref : (9, Cout, Cin)       per-tap conv1 weights (bf16)
      w2_ref : (9, Cout, Cout)      per-tap conv2 weights (bf16)
      ws_ref : (Cout, Cin)          1x1 shortcut weights with BN scale folded in
      b*/s*/t*: (Cout, 1)           conv bias and folded BN scale / shift (f32)
      o_ref  : (Cout, R*Wr)         band output (gap lanes stripped in wrapper)
      p2_ref : (Cout, (R+2)*Wr + 2) staging buffer for conv1 output (bf16)
    """
    if shortcut:
        (x_ref, w1_ref, b1_ref, s1_ref, t1_ref,
         w2_ref, b2_ref, s2_ref, t2_ref, ws_ref,
         o_ref, p2_ref) = refs
    else:
        (x_ref, w1_ref, b1_ref, s1_ref, t1_ref,
         w2_ref, b2_ref, s2_ref, t2_ref,
         o_ref, p2_ref) = refs
        ws_ref = None

    Cout = o_ref.shape[0]
    Wp = Wr - 1
    S1 = (R + 2) * Wr          # conv1 output lanes (band rows + 1-row halo each side)
    S2 = R * Wr                # conv2 / final output lanes
    band = pl.program_id(1)

    def conv3x3(src_ref, w_ref, n_lanes):
        # 9 accumulated tap matmuls: acc += w_tap(Cout,C) @ shifted_tap(C, n_lanes).
        acc = None
        for dy in range(3):
            for dx in range(3):
                off = dy * Wr + dx
                tap = src_ref[:, off:off + n_lanes]
                d = jnp.dot(w_ref[3 * dy + dx], tap,
                            preferred_element_type=jnp.float32)
                acc = d if acc is None else acc + d
        return acc

    # --- conv3x3 #1 (+bias) -> ReLU -> BN1 (folded affine), over R+2 rows ---
    acc1 = conv3x3(x_ref, w1_ref, S1)
    y1 = jnp.maximum(acc1 + b1_ref[...], 0.0) * s1_ref[...] + t1_ref[...]

    # Zero the per-row gap lane: it becomes conv2's left/right zero padding.
    col = lax.broadcasted_iota(jnp.int32, (1, S1), 1) % Wr
    y1 = jnp.where(col == Wp, 0.0, y1)

    # Stage y1 (bf16) with one zero lane on each side for the conv2 tap shifts.
    zlane = jnp.zeros((Cout, 1), p2_ref.dtype)
    p2_ref[:, 0:1] = zlane
    p2_ref[:, S1 + 1:S1 + 2] = zlane
    p2_ref[:, 1:S1 + 1] = y1.astype(p2_ref.dtype)

    # Halo rows outside the image (top of band 0 / bottom of the last band) must
    # be zero — they are conv2's zero padding in the full-image computation.
    zrow = jnp.zeros((Cout, Wr), p2_ref.dtype)

    @pl.when(band == 0)
    def _():
        p2_ref[:, 1:1 + Wr] = zrow

    @pl.when(band == nb - 1)
    def _():
        p2_ref[:, 1 + S1 - Wr:1 + S1] = zrow

    # --- conv3x3 #2 (+bias) -> ReLU -> BN2 (folded affine), over the R rows ---
    acc2 = conv3x3(p2_ref, w2_ref, S2)
    out = jnp.maximum(acc2 + b2_ref[...], 0.0) * s2_ref[...] + t2_ref[...]

    # --- optional shortcut: 1x1 conv (BN scale folded into ws, shift into t2) ---
    if shortcut:
        xc = x_ref[:, 1 + 2 * Wr:1 + 2 * Wr + S2]   # central R rows of the band
        out = out + jnp.dot(ws_ref[...], xc, preferred_element_type=jnp.float32)

    o_ref[...] = out


def _pick_band_rows(Hp, Wr, Cin, Cout, budget_bytes):
    """Largest divisor R of Hp whose per-step working set fits the VMEM budget."""
    best = 1
    for R in range(1, Hp + 1):
        if Hp % R:
            continue
        LB = (R + 4) * Wr + 2
        S1 = (R + 2) * Wr
        S2 = R * Wr
        est = (2 * Cin * LB * 2          # x band (bf16), double-buffered
               + 2 * Cout * S2 * 4       # output block (f32), double-buffered
               + Cout * (S1 + 2) * 2     # conv2 staging scratch (bf16)
               + 4 * Cout * S1 * 4)      # f32 accumulators / temporaries headroom
        if est <= budget_bytes:
            best = R
    return best


def conv_block_forward(x_nchw, params, *, pool=True, shortcut=False,
                       band_rows=None, compute_dtype=jnp.bfloat16,
                       vmem_budget_bytes=12 * 2**20):
    """Runs ConvBlock.forward on an NCHW input, returns NCHW output."""
    N, Cin, H, W = x_nchw.shape
    Cout = params["w1"].shape[-1]
    x = x_nchw.astype(jnp.float32)

    # 2x2 max-pool as a single XLA reduce; the kernel reads the pooled tensor.
    if pool:
        Hp, Wp = H // 2, W // 2
        x = jnp.max(x[:, :, :Hp * 2, :Wp * 2].reshape(N, Cin, Hp, 2, Wp, 2),
                    axis=(3, 5))
    else:
        Hp, Wp = H, W

    Wr = Wp + 1   # row stride: one zero gap lane per row = conv left/right zero pad

    if band_rows is None:
        R = _pick_band_rows(Hp, Wr, Cin, Cout, vmem_budget_bytes)
    else:
        R = max(d for d in range(1, min(int(band_rows), Hp) + 1) if Hp % d == 0)
    nb = Hp // R
    LB = (R + 4) * Wr + 2
    S2 = R * Wr

    # Strided, row-padded flat input: rows [-3, Hp+3), each row Wp data + 1 zero
    # gap lane, then per-band overlapping windows (2-row halo for the two fused
    # 3x3 convs) with one extra zero lane on each side.
    xs = jnp.pad(x, ((0, 0), (0, 0), (3, 3), (0, 1)))
    xf = xs.reshape(N, Cin, (Hp + 6) * Wr).astype(compute_dtype)
    xbands = jnp.stack(
        [xf[:, :, (b * R + 1) * Wr - 1:(b * R + 1) * Wr - 1 + LB]
         for b in range(nb)],
        axis=1)                                               # (N, nb, Cin, LB)

    def bn_affine(g, b, m, v, eps=1e-5):
        s = (g.astype(jnp.float32) / jnp.sqrt(v.astype(jnp.float32) + eps))
        t = b.astype(jnp.float32) - m.astype(jnp.float32) * s
        return s[:, None], t[:, None]

    # Per-tap weight matrices: tap t = 3*dy + dx holds the (dy, dx) kernel slice.
    w1t = jnp.transpose(params["w1"].astype(jnp.float32),
                        (0, 1, 3, 2)).reshape(9, Cout, Cin).astype(compute_dtype)
    w2t = jnp.transpose(params["w2"].astype(jnp.float32),
                        (0, 1, 3, 2)).reshape(9, Cout, Cout).astype(compute_dtype)
    b1 = params["b1"].astype(jnp.float32)[:, None]
    b2 = params["b2"].astype(jnp.float32)[:, None]
    s1, t1 = bn_affine(params["bn1_g"], params["bn1_b"], params["bn1_m"], params["bn1_v"])
    s2, t2 = bn_affine(params["bn2_g"], params["bn2_b"], params["bn2_m"], params["bn2_v"])

    if shortcut:
        ss, ts = bn_affine(params["bns_g"], params["bns_b"],
                           params["bns_m"], params["bns_v"])
        wsm = (ss * params["ws"].astype(jnp.float32).T).astype(compute_dtype)  # (Cout,Cin)
        t2 = t2 + ts   # fold the shortcut BN shift into the final affine shift

    args = [xbands, w1t, b1, s1, t1, w2t, b2, s2, t2]
    if shortcut:
        args.append(wsm)

    def rep(a):
        nd = a.ndim
        return pl.BlockSpec(a.shape, lambda *_: (0,) * nd)

    in_specs = [pl.BlockSpec((None, None, Cin, LB), lambda n, b: (n, b, 0, 0))]
    in_specs += [rep(a) for a in args[1:]]

    out4 = pl.pallas_call(
        functools.partial(_conv_block_kernel, shortcut, R, Wr, nb),
        out_shape=jax.ShapeDtypeStruct((N, nb, Cout, S2), jnp.float32),
        grid=(N, nb),
        in_specs=in_specs,
        out_specs=pl.BlockSpec((None, None, Cout, S2), lambda n, b: (n, b, 0, 0)),
        scratch_shapes=[pltpu.VMEM((Cout, (R + 2) * Wr + 2), compute_dtype)],
        compiler_params=pltpu.CompilerParams(
            dimension_semantics=("parallel", "parallel"),
            vmem_limit_bytes=48 * 2**20),
    )(*args)

    out = out4.reshape(N, nb, Cout, R, Wr)
    out = jnp.transpose(out, (0, 2, 1, 3, 4)).reshape(N, Cout, Hp, Wr)
    return out[..., :Wp]   # strip the per-row gap lane


def reference_forward(x, params, *, pool=True, shortcut=False):
    """Pure-JAX NCHW reference mirroring the PyTorch module (eval-mode BN)."""
    def conv(x, w_hwio, b=None, pad=1):
        w_oihw = jnp.transpose(w_hwio, (3, 2, 0, 1))
        y = lax.conv_general_dilated(x, w_oihw, (1, 1), [(pad, pad), (pad, pad)],
                                     dimension_numbers=("NCHW", "OIHW", "NCHW"))
        if b is not None:
            y = y + b.reshape(1, -1, 1, 1)
        return y

    def bn(x, g, b, m, v, eps=1e-5):
        rs = lambda a: a.reshape(1, -1, 1, 1)
        return (x - rs(m)) / jnp.sqrt(rs(v) + eps) * rs(g) + rs(b)

    if pool:
        x = lax.reduce_window(x, -jnp.inf, lax.max,
                              (1, 1, 2, 2), (1, 1, 2, 2), "VALID")
    y = conv(x, params["w1"], params["b1"], pad=1)
    y = jnp.maximum(y, 0.0)
    y = bn(y, params["bn1_g"], params["bn1_b"], params["bn1_m"], params["bn1_v"])
    y = conv(y, params["w2"], params["b2"], pad=1)
    y = jnp.maximum(y, 0.0)
    y = bn(y, params["bn2_g"], params["bn2_b"], params["bn2_m"], params["bn2_v"])
    if shortcut:
        ys = conv(x, params["ws"][None, None], None, pad=0)
        ys = bn(ys, params["bns_g"], params["bns_b"], params["bns_m"], params["bns_v"])
        y = y + ys
    return y


if __name__ == "__main__":
    N, Cin, H, W, Cout = 2, 4, 16, 16, 8
    key = jax.random.PRNGKey(0)
    keys = jax.random.split(key, 16)

    x = jax.random.normal(keys[0], (N, Cin, H, W), jnp.float32)
    params = {
        # conv weights stored HWIO (3, 3, Cin, Cout); biases (Cout,)
        "w1": 0.3 * jax.random.normal(keys[1], (3, 3, Cin, Cout), jnp.float32),
        "b1": 0.1 * jax.random.normal(keys[2], (Cout,), jnp.float32),
        "bn1_g": 1.0 + 0.1 * jax.random.normal(keys[3], (Cout,), jnp.float32),
        "bn1_b": 0.1 * jax.random.normal(keys[4], (Cout,), jnp.float32),
        "bn1_m": 0.1 * jax.random.normal(keys[5], (Cout,), jnp.float32),
        "bn1_v": jax.random.uniform(keys[6], (Cout,), jnp.float32, 0.5, 1.5),
        "w2": 0.3 * jax.random.normal(keys[7], (3, 3, Cout, Cout), jnp.float32),
        "b2": 0.1 * jax.random.normal(keys[8], (Cout,), jnp.float32),
        "bn2_g": 1.0 + 0.1 * jax.random.normal(keys[9], (Cout,), jnp.float32),
        "bn2_b": 0.1 * jax.random.normal(keys[10], (Cout,), jnp.float32),
        "bn2_m": 0.1 * jax.random.normal(keys[11], (Cout,), jnp.float32),
        "bn2_v": jax.random.uniform(keys[12], (Cout,), jnp.float32, 0.5, 1.5),
        # shortcut: 1x1 conv (no bias) + BN
        "ws": 0.3 * jax.random.normal(keys[13], (Cin, Cout), jnp.float32),
        "bns_g": 1.0 + 0.1 * jax.random.normal(keys[14], (Cout,), jnp.float32),
        "bns_b": 0.1 * jax.random.normal(keys[15], (Cout,), jnp.float32),
        "bns_m": jnp.zeros((Cout,), jnp.float32),
        "bns_v": jnp.ones((Cout,), jnp.float32),
    }

    # Config A: pool + shortcut, forced multi-band grid (exercises band halos).
    out_a = conv_block_forward(x, params, pool=True, shortcut=True, band_rows=4)
    out_a = jax.block_until_ready(out_a)
    ref_a = reference_forward(x, params, pool=True, shortcut=True)
    assert out_a.shape == (N, Cout, H // 2, W // 2), out_a.shape
    err_a = float(jnp.max(jnp.abs(out_a - ref_a)))
    tol_a = 3e-2 * (1.0 + float(jnp.max(jnp.abs(ref_a))))
    if err_a > tol_a:
        raise AssertionError(f"config A mismatch: max abs err {err_a} > {tol_a}")

    # Config B: no pool, no shortcut, auto band size (single band).
    out_b = conv_block_forward(x, params, pool=False, shortcut=False)
    out_b = jax.block_until_ready(out_b)
    ref_b = reference_forward(x, params, pool=False, shortcut=False)
    assert out_b.shape == (N, Cout, H, W), out_b.shape
    err_b = float(jnp.max(jnp.abs(out_b - ref_b)))
    tol_b = 3e-2 * (1.0 + float(jnp.max(jnp.abs(ref_b))))
    if err_b > tol_b:
        raise AssertionError(f"config B mismatch: max abs err {err_b} > {tol_b}")

    print("KERNEL_OK")
</pallas_src>

<mosaic_0001>
module attributes {stable_mosaic.version = 11 : i64} {
  func.func @_conv_block_kernel(%arg0: i32, %arg1: i32, %arg2: memref<1x1x4x74xbf16, #tpu.memory_space<vmem>>, %arg3: memref<9x8x4xbf16, #tpu.memory_space<vmem>>, %arg4: memref<8x1xf32, #tpu.memory_space<vmem>>, %arg5: memref<8x1xf32, #tpu.memory_space<vmem>>, %arg6: memref<8x1xf32, #tpu.memory_space<vmem>>, %arg7: memref<9x8x8xbf16, #tpu.memory_space<vmem>>, %arg8: memref<8x1xf32, #tpu.memory_space<vmem>>, %arg9: memref<8x1xf32, #tpu.memory_space<vmem>>, %arg10: memref<8x1xf32, #tpu.memory_space<vmem>>, %arg11: memref<8x4xbf16, #tpu.memory_space<vmem>>, %arg12: memref<1x1x8x36xf32, #tpu.memory_space<vmem>>, %arg13: memref<8x56xbf16, #tpu.memory_space<vmem>>) attributes {dimension_semantics = [#tpu.dimension_semantics<parallel>, #tpu.dimension_semantics<parallel>], iteration_bounds = array<i64: 2, 2>, scalar_prefetch = 0 : i64, scratch_operands = 1 : i64, tpu.core_type = #tpu.core_type<tc>, window_params = [{transform_indices = @transform_0, window_bounds = array<i64: 1, 1, 4, 74>}, {pipeline_mode = #tpu.pipeline_mode<synchronous>, transform_indices = @transform_1, window_bounds = array<i64: 9, 8, 4>}, {pipeline_mode = #tpu.pipeline_mode<synchronous>, transform_indices = @transform_2, window_bounds = array<i64: 8, 1>}, {pipeline_mode = #tpu.pipeline_mode<synchronous>, transform_indices = @transform_3, window_bounds = array<i64: 8, 1>}, {pipeline_mode = #tpu.pipeline_mode<synchronous>, transform_indices = @transform_4, window_bounds = array<i64: 8, 1>}, {pipeline_mode = #tpu.pipeline_mode<synchronous>, transform_indices = @transform_5, window_bounds = array<i64: 9, 8, 8>}, {pipeline_mode = #tpu.pipeline_mode<synchronous>, transform_indices = @transform_6, window_bounds = array<i64: 8, 1>}, {pipeline_mode = #tpu.pipeline_mode<synchronous>, transform_indices = @transform_7, window_bounds = array<i64: 8, 1>}, {pipeline_mode = #tpu.pipeline_mode<synchronous>, transform_indices = @transform_8, window_bounds = array<i64: 8, 1>}, {pipeline_mode = #tpu.pipeline_mode<synchronous>, transform_indices = @transform_9, window_bounds = array<i64: 8, 4>}, {transform_indices = @transform_10, window_bounds = array<i64: 1, 1, 8, 36>}]} {
    %c0 = arith.constant 0 : index
    %c0_0 = arith.constant 0 : index
    %c0_1 = arith.constant 0 : index
    %c0_2 = arith.constant 0 : index
    %0 = vector.load %arg2[%c0, %c0_0, %c0_1, %c0_2] : memref<1x1x4x74xbf16, #tpu.memory_space<vmem>>, vector<1x1x4x54xbf16>
    %1 = vector.shape_cast %0 : vector<1x1x4x54xbf16> to vector<4x54xbf16>
    %c0_3 = arith.constant 0 : index
    %c0_4 = arith.constant 0 : index
    %c0_5 = arith.constant 0 : index
    %2 = vector.load %arg3[%c0_3, %c0_4, %c0_5] : memref<9x8x4xbf16, #tpu.memory_space<vmem>>, vector<1x8x4xbf16>
    %3 = vector.shape_cast %2 : vector<1x8x4xbf16> to vector<8x4xbf16>
    %cst = arith.constant dense<0.000000e+00> : vector<8x54xf32>
    %4 = tpu.matmul %3, %1, %cst {dimension_numbers = #tpu.dot_dimension_numbers<[1], [0], [0], [1], [0, 0, 1, 1], [], []>} : vector<8x4xbf16>, vector<4x54xbf16>, vector<8x54xf32> -> vector<8x54xf32>
    %c0_6 = arith.constant 0 : index
    %c0_7 = arith.constant 0 : index
    %c0_8 = arith.constant 0 : index
    %c1 = arith.constant 1 : index
    %5 = vector.load %arg2[%c0_6, %c0_7, %c0_8, %c1] : memref<1x1x4x74xbf16, #tpu.memory_space<vmem>>, vector<1x1x4x54xbf16>
    %6 = vector.shape_cast %5 : vector<1x1x4x54xbf16> to vector<4x54xbf16>
    %c1_9 = arith.constant 1 : index
    %c0_10 = arith.constant 0 : index
    %c0_11 = arith.constant 0 : index
    %7 = vector.load %arg3[%c1_9, %c0_10, %c0_11] : memref<9x8x4xbf16, #tpu.memory_space<vmem>>, vector<1x8x4xbf16>
    %8 = vector.shape_cast %7 : vector<1x8x4xbf16> to vector<8x4xbf16>
    %cst_12 = arith.constant dense<0.000000e+00> : vector<8x54xf32>
    %9 = tpu.matmul %8, %6, %cst_12 {dimension_numbers = #tpu.dot_dimension_numbers<[1], [0], [0], [1], [0, 0, 1, 1], [], []>} : vector<8x4xbf16>, vector<4x54xbf16>, vector<8x54xf32> -> vector<8x54xf32>
    %10 = arith.addf %4, %9 : vector<8x54xf32>
    %c0_13 = arith.constant 0 : index
    %c0_14 = arith.constant 0 : index
    %c0_15 = arith.constant 0 : index
    %c2 = arith.constant 2 : index
    %11 = vector.load %arg2[%c0_13, %c0_14, %c0_15, %c2] : memref<1x1x4x74xbf16, #tpu.memory_space<vmem>>, vector<1x1x4x54xbf16>
    %12 = vector.shape_cast %11 : vector<1x1x4x54xbf16> to vector<4x54xbf16>
    %c2_16 = arith.constant 2 : index
    %c0_17 = arith.constant 0 : index
    %c0_18 = arith.constant 0 : index
    %13 = vector.load %arg3[%c2_16, %c0_17, %c0_18] : memref<9x8x4xbf16, #tpu.memory_space<vmem>>, vector<1x8x4xbf16>
    %14 = vector.shape_cast %13 : vector<1x8x4xbf16> to vector<8x4xbf16>
    %cst_19 = arith.constant dense<0.000000e+00> : vector<8x54xf32>
    %15 = tpu.matmul %14, %12, %cst_19 {dimension_numbers = #tpu.dot_dimension_numbers<[1], [0], [0], [1], [0, 0, 1, 1], [], []>} : vector<8x4xbf16>, vector<4x54xbf16>, vector<8x54xf32> -> vector<8x54xf32>
    %16 = arith.addf %10, %15 : vector<8x54xf32>
    %c0_20 = arith.constant 0 : index
    %c0_21 = arith.constant 0 : index
    %c0_22 = arith.constant 0 : index
    %c9 = arith.constant 9 : index
    %17 = vector.load %arg2[%c0_20, %c0_21, %c0_22, %c9] : memref<1x1x4x74xbf16, #tpu.memory_space<vmem>>, vector<1x1x4x54xbf16>
    %18 = vector.shape_cast %17 : vector<1x1x4x54xbf16> to vector<4x54xbf16>
    %c3 = arith.constant 3 : index
    %c0_23 = arith.constant 0 : index
    %c0_24 = arith.constant 0 : index
    %19 = vector.load %arg3[%c3, %c0_23, %c0_24] : memref<9x8x4xbf16, #tpu.memory_space<vmem>>, vector<1x8x4xbf16>
    %20 = vector.shape_cast %19 : vector<1x8x4xbf16> to vector<8x4xbf16>
    %cst_25 = arith.constant dense<0.000000e+00> : vector<8x54xf32>
    %21 = tpu.matmul %20, %18, %cst_25 {dimension_numbers = #tpu.dot_dimension_numbers<[1], [0], [0], [1], [0, 0, 1, 1], [], []>} : vector<8x4xbf16>, vector<4x54xbf16>, vector<8x54xf32> -> vector<8x54xf32>
    %22 = arith.addf %16, %21 : vector<8x54xf32>
    %c0_26 = arith.constant 0 : index
    %c0_27 = arith.constant 0 : index
    %c0_28 = arith.constant 0 : index
    %c10 = arith.constant 10 : index
    %23 = vector.load %arg2[%c0_26, %c0_27, %c0_28, %c10] : memref<1x1x4x74xbf16, #tpu.memory_space<vmem>>, vector<1x1x4x54xbf16>
    %24 = vector.shape_cast %23 : vector<1x1x4x54xbf16> to vector<4x54xbf16>
    %c4 = arith.constant 4 : index
    %c0_29 = arith.constant 0 : index
    %c0_30 = arith.constant 0 : index
    %25 = vector.load %arg3[%c4, %c0_29, %c0_30] : memref<9x8x4xbf16, #tpu.memory_space<vmem>>, vector<1x8x4xbf16>
    %26 = vector.shape_cast %25 : vector<1x8x4xbf16> to vector<8x4xbf16>
    %cst_31 = arith.constant dense<0.000000e+00> : vector<8x54xf32>
    %27 = tpu.matmul %26, %24, %cst_31 {dimension_numbers = #tpu.dot_dimension_numbers<[1], [0], [0], [1], [0, 0, 1, 1], [], []>} : vector<8x4xbf16>, vector<4x54xbf16>, vector<8x54xf32> -> vector<8x54xf32>
    %28 = arith.addf %22, %27 : vector<8x54xf32>
    %c0_32 = arith.constant 0 : index
    %c0_33 = arith.constant 0 : index
    %c0_34 = arith.constant 0 : index
    %c11 = arith.constant 11 : index
    %29 = vector.load %arg2[%c0_32, %c0_33, %c0_34, %c11] : memref<1x1x4x74xbf16, #tpu.memory_space<vmem>>, vector<1x1x4x54xbf16>
    %30 = vector.shape_cast %29 : vector<1x1x4x54xbf16> to vector<4x54xbf16>
    %c5 = arith.constant 5 : index
    %c0_35 = arith.constant 0 : index
    %c0_36 = arith.constant 0 : index
    %31 = vector.load %arg3[%c5, %c0_35, %c0_36] : memref<9x8x4xbf16, #tpu.memory_space<vmem>>, vector<1x8x4xbf16>
    %32 = vector.shape_cast %31 : vector<1x8x4xbf16> to vector<8x4xbf16>
    %cst_37 = arith.constant dense<0.000000e+00> : vector<8x54xf32>
    %33 = tpu.matmul %32, %30, %cst_37 {dimension_numbers = #tpu.dot_dimension_numbers<[1], [0], [0], [1], [0, 0, 1, 1], [], []>} : vector<8x4xbf16>, vector<4x54xbf16>, vector<8x54xf32> -> vector<8x54xf32>
    %34 = arith.addf %28, %33 : vector<8x54xf32>
    %c0_38 = arith.constant 0 : index
    %c0_39 = arith.constant 0 : index
    %c0_40 = arith.constant 0 : index
    %c18 = arith.constant 18 : index
    %35 = vector.load %arg2[%c0_38, %c0_39, %c0_40, %c18] : memref<1x1x4x74xbf16, #tpu.memory_space<vmem>>, vector<1x1x4x54xbf16>
    %36 = vector.shape_cast %35 : vector<1x1x4x54xbf16> to vector<4x54xbf16>
    %c6 = arith.constant 6 : index
    %c0_41 = arith.constant 0 : index
    %c0_42 = arith.constant 0 : index
    %37 = vector.load %arg3[%c6, %c0_41, %c0_42] : memref<9x8x4xbf16, #tpu.memory_space<vmem>>, vector<1x8x4xbf16>
    %38 = vector.shape_cast %37 : vector<1x8x4xbf16> to vector<8x4xbf16>
    %cst_43 = arith.constant dense<0.000000e+00> : vector<8x54xf32>
    %39 = tpu.matmul %38, %36, %cst_43 {dimension_numbers = #tpu.dot_dimension_numbers<[1], [0], [0], [1], [0, 0, 1, 1], [], []>} : vector<8x4xbf16>, vector<4x54xbf16>, vector<8x54xf32> -> vector<8x54xf32>
    %40 = arith.addf %34, %39 : vector<8x54xf32>
    %c0_44 = arith.constant 0 : index
    %c0_45 = arith.constant 0 : index
    %c0_46 = arith.constant 0 : index
    %c19 = arith.constant 19 : index
    %41 = vector.load %arg2[%c0_44, %c0_45, %c0_46, %c19] : memref<1x1x4x74xbf16, #tpu.memory_space<vmem>>, vector<1x1x4x54xbf16>
    %42 = vector.shape_cast %41 : vector<1x1x4x54xbf16> to vector<4x54xbf16>
    %c7 = arith.constant 7 : index
    %c0_47 = arith.constant 0 : index
    %c0_48 = arith.constant 0 : index
    %43 = vector.load %arg3[%c7, %c0_47, %c0_48] : memref<9x8x4xbf16, #tpu.memory_space<vmem>>, vector<1x8x4xbf16>
    %44 = vector.shape_cast %43 : vector<1x8x4xbf16> to vector<8x4xbf16>
    %cst_49 = arith.constant dense<0.000000e+00> : vector<8x54xf32>
    %45 = tpu.matmul %44, %42, %cst_49 {dimension_numbers = #tpu.dot_dimension_numbers<[1], [0], [0], [1], [0, 0, 1, 1], [], []>} : vector<8x4xbf16>, vector<4x54xbf16>, vector<8x54xf32> -> vector<8x54xf32>
    %46 = arith.addf %40, %45 : vector<8x54xf32>
    %c0_50 = arith.constant 0 : index
    %c0_51 = arith.constant 0 : index
    %c0_52 = arith.constant 0 : index
    %c20 = arith.constant 20 : index
    %47 = vector.load %arg2[%c0_50, %c0_51, %c0_52, %c20] : memref<1x1x4x74xbf16, #tpu.memory_space<vmem>>, vector<1x1x4x54xbf16>
    %48 = vector.shape_cast %47 : vector<1x1x4x54xbf16> to vector<4x54xbf16>
    %c8 = arith.constant 8 : index
    %c0_53 = arith.constant 0 : index
    %c0_54 = arith.constant 0 : index
    %49 = vector.load %arg3[%c8, %c0_53, %c0_54] : memref<9x8x4xbf16, #tpu.memory_space<vmem>>, vector<1x8x4xbf16>
    %50 = vector.shape_cast %49 : vector<1x8x4xbf16> to vector<8x4xbf16>
    %cst_55 = arith.constant dense<0.000000e+00> : vector<8x54xf32>
    %51 = tpu.matmul %50, %48, %cst_55 {dimension_numbers = #tpu.dot_dimension_numbers<[1], [0], [0], [1], [0, 0, 1, 1], [], []>} : vector<8x4xbf16>, vector<4x54xbf16>, vector<8x54xf32> -> vector<8x54xf32>
    %52 = arith.addf %46, %51 : vector<8x54xf32>
    %c0_56 = arith.constant 0 : index
    %c0_57 = arith.constant 0 : index
    %53 = vector.load %arg4[%c0_56, %c0_57] : memref<8x1xf32, #tpu.memory_space<vmem>>, vector<8x1xf32>
    %54 = vector.broadcast %53 : vector<8x1xf32> to vector<8x54xf32>
    %55 = arith.addf %52, %54 : vector<8x54xf32>
    %cst_58 = arith.constant 0.000000e+00 : f32
    %56 = vector.broadcast %cst_58 : f32 to vector<8x54xf32>
    %57 = arith.maximumf %55, %56 : vector<8x54xf32>
    %c0_59 = arith.constant 0 : index
    %c0_60 = arith.constant 0 : index
    %58 = vector.load %arg5[%c0_59, %c0_60] : memref<8x1xf32, #tpu.memory_space<vmem>>, vector<8x1xf32>
    %59 = vector.broadcast %58 : vector<8x1xf32> to vector<8x54xf32>
    %60 = arith.mulf %57, %59 : vector<8x54xf32>
    %c0_61 = arith.constant 0 : index
    %c0_62 = arith.constant 0 : index
    %61 = vector.load %arg6[%c0_61, %c0_62] : memref<8x1xf32, #tpu.memory_space<vmem>>, vector<8x1xf32>
    %62 = vector.broadcast %61 : vector<8x1xf32> to vector<8x54xf32>
    %63 = arith.addf %60, %62 : vector<8x54xf32>
    %64 = tpu.iota {dimensions = array<i32: 1>} : vector<1x54xi32>
    %c9_i32 = arith.constant 9 : i32
    %c0_i32 = arith.constant 0 : i32
    %65 = arith.cmpi eq, %c9_i32, %c0_i32 : i32
    %c1_i32 = arith.constant 1 : i32
    %66 = arith.select %65, %c1_i32, %c9_i32 : i32
    %67 = vector.broadcast %66 : i32 to vector<1x54xi32>
    %68 = arith.remsi %64, %67 : vector<1x54xi32>
    %c0_i32_63 = arith.constant 0 : i32
    %69 = vector.broadcast %c0_i32_63 : i32 to vector<1x54xi32>
    %70 = arith.cmpi ne, %68, %69 : vector<1x54xi32>
    %c0_i32_64 = arith.constant 0 : i32
    %71 = vector.broadcast %c0_i32_64 : i32 to vector<1x54xi32>
    %72 = arith.cmpi slt, %68, %71 : vector<1x54xi32>
    %c0_i32_65 = arith.constant 0 : i32
    %73 = arith.cmpi slt, %66, %c0_i32_65 : i32
    %74 = vector.broadcast %73 : i1 to vector<1x54xi1>
    %75 = vector.broadcast %74 : vector<1x54xi1> to vector<1x54xi1>
    %76 = arith.xori %72, %75 : vector<1x54xi1>
    %77 = arith.andi %76, %70 : vector<1x54xi1>
    %78 = vector.broadcast %66 : i32 to vector<1x54xi32>
    %79 = arith.addi %68, %78 : vector<1x54xi32>
    %80 = arith.select %77, %79, %68 : vector<1x54xi1>, vector<1x54xi32>
    %c8_i32 = arith.constant 8 : i32
    %81 = vector.broadcast %c8_i32 : i32 to vector<1x54xi32>
    %82 = arith.cmpi eq, %80, %81 : vector<1x54xi32>
    %cst_66 = arith.constant 0.000000e+00 : f32
    %83 = vector.shape_cast %82 : vector<1x54xi1> to vector<1x54xi1>
    %84 = vector.broadcast %83 : vector<1x54xi1> to vector<8x54xi1>
    %85 = vector.broadcast %cst_66 : f32 to vector<8x54xf32>
    %86 = arith.select %84, %85, %63 : vector<8x54xi1>, vector<8x54xf32>
    %cst_67 = arith.constant 0.000000e+00 : bf16
    %87 = vector.broadcast %cst_67 : bf16 to vector<8x1xbf16>
    %c0_68 = arith.constant 0 : index
    %c0_69 = arith.constant 0 : index
    %88 = vector.load %arg13[%c0_68, %c0_69] : memref<8x56xbf16, #tpu.memory_space<vmem>>, vector<8x1xbf16>
    tpu.vector_store %arg13[%c0_68, %c0_69], %87 {strides = array<i32>} : memref<8x56xbf16, #tpu.memory_space<vmem>>, vector<8x1xbf16>,
    %c0_70 = arith.constant 0 : index
    %c55 = arith.constant 55 : index
    %89 = vector.load %arg13[%c0_70, %c55] : memref<8x56xbf16, #tpu.memory_space<vmem>>, vector<8x1xbf16>
    tpu.vector_store %arg13[%c0_70, %c55], %87 {strides = array<i32>} : memref<8x56xbf16, #tpu.memory_space<vmem>>, vector<8x1xbf16>,
    %90 = arith.truncf %86 : vector<8x54xf32> to vector<8x54xbf16>
    %c0_71 = arith.constant 0 : index
    %c1_72 = arith.constant 1 : index
    %91 = vector.load %arg13[%c0_71, %c1_72] : memref<8x56xbf16, #tpu.memory_space<vmem>>, vector<8x54xbf16>
    tpu.vector_store %arg13[%c0_71, %c1_72], %90 {strides = array<i32>} : memref<8x56xbf16, #tpu.memory_space<vmem>>, vector<8x54xbf16>,
    %cst_73 = arith.constant 0.000000e+00 : bf16
    %92 = vector.broadcast %cst_73 : bf16 to vector<8x9xbf16>
    %c0_i32_74 = arith.constant 0 : i32
    %93 = arith.cmpi eq, %arg1, %c0_i32_74 : i32
    %94 = arith.extui %93 : i1 to i32
    %c0_i32_75 = arith.constant 0 : i32
    %95 = arith.cmpi ne, %94, %c0_i32_75 : i32
    scf.if %95 {
      %c0_150 = arith.constant 0 : index
      %c1_151 = arith.constant 1 : index
      %162 = vector.load %arg13[%c0_150, %c1_151] : memref<8x56xbf16, #tpu.memory_space<vmem>>, vector<8x9xbf16>
      tpu.vector_store %arg13[%c0_150, %c1_151], %92 {strides = array<i32>} : memref<8x56xbf16, #tpu.memory_space<vmem>>, vector<8x9xbf16>,
    } else {
    }
    %c1_i32_76 = arith.constant 1 : i32
    %96 = arith.cmpi eq, %arg1, %c1_i32_76 : i32
    %97 = arith.extui %96 : i1 to i32
    %c0_i32_77 = arith.constant 0 : i32
    %98 = arith.cmpi ne, %97, %c0_i32_77 : i32
    scf.if %98 {
      %c0_150 = arith.constant 0 : index
      %c46 = arith.constant 46 : index
      %162 = vector.load %arg13[%c0_150, %c46] : memref<8x56xbf16, #tpu.memory_space<vmem>>, vector<8x9xbf16>
      tpu.vector_store %arg13[%c0_150, %c46], %92 {strides = array<i32>} : memref<8x56xbf16, #tpu.memory_space<vmem>>, vector<8x9xbf16>,
    } else {
    }
    %c0_78 = arith.constant 0 : index
    %c0_79 = arith.constant 0 : index
    %99 = vector.load %arg13[%c0_78, %c0_79] : memref<8x56xbf16, #tpu.memory_space<vmem>>, vector<8x36xbf16>
    %c0_80 = arith.constant 0 : index
    %c0_81 = arith.constant 0 : index
    %c0_82 = arith.constant 0 : index
    %100 = vector.load %arg7[%c0_80, %c0_81, %c0_82] : memref<9x8x8xbf16, #tpu.memory_space<vmem>>, vector<1x8x8xbf16>
    %101 = vector.shape_cast %100 : vector<1x8x8xbf16> to vector<8x8xbf16>
    %cst_83 = arith.constant dense<0.000000e+00> : vector<8x36xf32>
    %102 = tpu.matmul %101, %99, %cst_83 {dimension_numbers = #tpu.dot_dimension_numbers<[1], [0], [0], [1], [0, 0, 1, 1], [], []>} : vector<8x8xbf16>, vector<8x36xbf16>, vector<8x36xf32> -> vector<8x36xf32>
    %c0_84 = arith.constant 0 : index
    %c1_85 = arith.constant 1 : index
    %103 = vector.load %arg13[%c0_84, %c1_85] : memref<8x56xbf16, #tpu.memory_space<vmem>>, vector<8x36xbf16>
    %c1_86 = arith.constant 1 : index
    %c0_87 = arith.constant 0 : index
    %c0_88 = arith.constant 0 : index
    %104 = vector.load %arg7[%c1_86, %c0_87, %c0_88] : memref<9x8x8xbf16, #tpu.memory_space<vmem>>, vector<1x8x8xbf16>
    %105 = vector.shape_cast %104 : vector<1x8x8xbf16> to vector<8x8xbf16>
    %cst_89 = arith.constant dense<0.000000e+00> : vector<8x36xf32>
    %106 = tpu.matmul %105, %103, %cst_89 {dimension_numbers = #tpu.dot_dimension_numbers<[1], [0], [0], [1], [0, 0, 1, 1], [], []>} : vector<8x8xbf16>, vector<8x36xbf16>, vector<8x36xf32> -> vector<8x36xf32>
    %107 = arith.addf %102, %106 : vector<8x36xf32>
    %c0_90 = arith.constant 0 : index
    %c2_91 = arith.constant 2 : index
    %108 = vector.load %arg13[%c0_90, %c2_91] : memref<8x56xbf16, #tpu.memory_space<vmem>>, vector<8x36xbf16>
    %c2_92 = arith.constant 2 : index
    %c0_93 = arith.constant 0 : index
    %c0_94 = arith.constant 0 : index
    %109 = vector.load %arg7[%c2_92, %c0_93, %c0_94] : memref<9x8x8xbf16, #tpu.memory_space<vmem>>, vector<1x8x8xbf16>
    %110 = vector.shape_cast %109 : vector<1x8x8xbf16> to vector<8x8xbf16>
    %cst_95 = arith.constant dense<0.000000e+00> : vector<8x36xf32>
    %111 = tpu.matmul %110, %108, %cst_95 {dimension_numbers = #tpu.dot_dimension_numbers<[1], [0], [0], [1], [0, 0, 1, 1], [], []>} : vector<8x8xbf16>, vector<8x36xbf16>, vector<8x36xf32> -> vector<8x36xf32>
    %112 = arith.addf %107, %111 : vector<8x36xf32>
    %c0_96 = arith.constant 0 : index
    %c9_97 = arith.constant 9 : index
    %113 = vector.load %arg13[%c0_96, %c9_97] : memref<8x56xbf16, #tpu.memory_space<vmem>>, vector<8x36xbf16>
    %c3_98 = arith.constant 3 : index
    %c0_99 = arith.constant 0 : index
    %c0_100 = arith.constant 0 : index
    %114 = vector.load %arg7[%c3_98, %c0_99, %c0_100] : memref<9x8x8xbf16, #tpu.memory_space<vmem>>, vector<1x8x8xbf16>
    %115 = vector.shape_cast %114 : vector<1x8x8xbf16> to vector<8x8xbf16>
    %cst_101 = arith.constant dense<0.000000e+00> : vector<8x36xf32>
    %116 = tpu.matmul %115, %113, %cst_101 {dimension_numbers = #tpu.dot_dimension_numbers<[1], [0], [0], [1], [0, 0, 1, 1], [], []>} : vector<8x8xbf16>, vector<8x36xbf16>, vector<8x36xf32> -> vector<8x36xf32>
    %117 = arith.addf %112, %116 : vector<8x36xf32>
    %c0_102 = arith.constant 0 : index
    %c10_103 = arith.constant 10 : index
    %118 = vector.load %arg13[%c0_102, %c10_103] : memref<8x56xbf16, #tpu.memory_space<vmem>>, vector<8x36xbf16>
    %c4_104 = arith.constant 4 : index
    %c0_105 = arith.constant 0 : index
    %c0_106 = arith.constant 0 : index
    %119 = vector.load %arg7[%c4_104, %c0_105, %c0_106] : memref<9x8x8xbf16, #tpu.memory_space<vmem>>, vector<1x8x8xbf16>
    %120 = vector.shape_cast %119 : vector<1x8x8xbf16> to vector<8x8xbf16>
    %cst_107 = arith.constant dense<0.000000e+00> : vector<8x36xf32>
    %121 = tpu.matmul %120, %118, %cst_107 {dimension_numbers = #tpu.dot_dimension_numbers<[1], [0], [0], [1], [0, 0, 1, 1], [], []>} : vector<8x8xbf16>, vector<8x36xbf16>, vector<8x36xf32> -> vector<8x36xf32>
    %122 = arith.addf %117, %121 : vector<8x36xf32>
    %c0_108 = arith.constant 0 : index
    %c11_109 = arith.constant 11 : index
    %123 = vector.load %arg13[%c0_108, %c11_109] : memref<8x56xbf16, #tpu.memory_space<vmem>>, vector<8x36xbf16>
    %c5_110 = arith.constant 5 : index
    %c0_111 = arith.constant 0 : index
    %c0_112 = arith.constant 0 : index
    %124 = vector.load %arg7[%c5_110, %c0_111, %c0_112] : memref<9x8x8xbf16, #tpu.memory_space<vmem>>, vector<1x8x8xbf16>
    %125 = vector.shape_cast %124 : vector<1x8x8xbf16> to vector<8x8xbf16>
    %cst_113 = arith.constant dense<0.000000e+00> : vector<8x36xf32>
    %126 = tpu.matmul %125, %123, %cst_113 {dimension_numbers = #tpu.dot_dimension_numbers<[1], [0], [0], [1], [0, 0, 1, 1], [], []>} : vector<8x8xbf16>, vector<8x36xbf16>, vector<8x36xf32> -> vector<8x36xf32>
    %127 = arith.addf %122, %126 : vector<8x36xf32>
    %c0_114 = arith.constant 0 : index
    %c18_115 = arith.constant 18 : index
    %128 = vector.load %arg13[%c0_114, %c18_115] : memref<8x56xbf16, #tpu.memory_space<vmem>>, vector<8x36xbf16>
    %c6_116 = arith.constant 6 : index
    %c0_117 = arith.constant 0 : index
    %c0_118 = arith.constant 0 : index
    %129 = vector.load %arg7[%c6_116, %c0_117, %c0_118] : memref<9x8x8xbf16, #tpu.memory_space<vmem>>, vector<1x8x8xbf16>
    %130 = vector.shape_cast %129 : vector<1x8x8xbf16> to vector<8x8xbf16>
    %cst_119 = arith.constant dense<0.000000e+00> : vector<8x36xf32>
    %131 = tpu.matmul %130, %128, %cst_119 {dimension_numbers = #tpu.dot_dimension_numbers<[1], [0], [0], [1], [0, 0, 1, 1], [], []>} : vector<8x8xbf16>, vector<8x36xbf16>, vector<8x36xf32> -> vector<8x36xf32>
    %132 = arith.addf %127, %131 : vector<8x36xf32>
    %c0_120 = arith.constant 0 : index
    %c19_121 = arith.constant 19 : index
    %133 = vector.load %arg13[%c0_120, %c19_121] : memref<8x56xbf16, #tpu.memory_space<vmem>>, vector<8x36xbf16>
    %c7_122 = arith.constant 7 : index
    %c0_123 = arith.constant 0 : index
    %c0_124 = arith.constant 0 : index
    %134 = vector.load %arg7[%c7_122, %c0_123, %c0_124] : memref<9x8x8xbf16, #tpu.memory_space<vmem>>, vector<1x8x8xbf16>
    %135 = vector.shape_cast %134 : vector<1x8x8xbf16> to vector<8x8xbf16>
    %cst_125 = arith.constant dense<0.000000e+00> : vector<8x36xf32>
    %136 = tpu.matmul %135, %133, %cst_125 {dimension_numbers = #tpu.dot_dimension_numbers<[1], [0], [0], [1], [0, 0, 1, 1], [], []>} : vector<8x8xbf16>, vector<8x36xbf16>, vector<8x36xf32> -> vector<8x36xf32>
    %137 = arith.addf %132, %136 : vector<8x36xf32>
    %c0_126 = arith.constant 0 : index
    %c20_127 = arith.constant 20 : index
    %138 = vector.load %arg13[%c0_126, %c20_127] : memref<8x56xbf16, #tpu.memory_space<vmem>>, vector<8x36xbf16>
    %c8_128 = arith.constant 8 : index
    %c0_129 = arith.constant 0 : index
    %c0_130 = arith.constant 0 : index
    %139 = vector.load %arg7[%c8_128, %c0_129, %c0_130] : memref<9x8x8xbf16, #tpu.memory_space<vmem>>, vector<1x8x8xbf16>
    %140 = vector.shape_cast %139 : vector<1x8x8xbf16> to vector<8x8xbf16>
    %cst_131 = arith.constant dense<0.000000e+00> : vector<8x36xf32>
    %141 = tpu.matmul %140, %138, %cst_131 {dimension_numbers = #tpu.dot_dimension_numbers<[1], [0], [0], [1], [0, 0, 1, 1], [], []>} : vector<8x8xbf16>, vector<8x36xbf16>, vector<8x36xf32> -> vector<8x36xf32>
    %142 = arith.addf %137, %141 : vector<8x36xf32>
    %c0_132 = arith.constant 0 : index
    %c0_133 = arith.constant 0 : index
    %143 = vector.load %arg8[%c0_132, %c0_133] : memref<8x1xf32, #tpu.memory_space<vmem>>, vector<8x1xf32>
    %144 = vector.broadcast %143 : vector<8x1xf32> to vector<8x36xf32>
    %145 = arith.addf %142, %144 : vector<8x36xf32>
    %cst_134 = arith.constant 0.000000e+00 : f32
    %146 = vector.broadcast %cst_134 : f32 to vector<8x36xf32>
    %147 = arith.maximumf %145, %146 : vector<8x36xf32>
    %c0_135 = arith.constant 0 : index
    %c0_136 = arith.constant 0 : index
    %148 = vector.load %arg9[%c0_135, %c0_136] : memref<8x1xf32, #tpu.memory_space<vmem>>, vector<8x1xf32>
    %149 = vector.broadcast %148 : vector<8x1xf32> to vector<8x36xf32>
    %150 = arith.mulf %147, %149 : vector<8x36xf32>
    %c0_137 = arith.constant 0 : index
    %c0_138 = arith.constant 0 : index
    %151 = vector.load %arg10[%c0_137, %c0_138] : memref<8x1xf32, #tpu.memory_space<vmem>>, vector<8x1xf32>
    %152 = vector.broadcast %151 : vector<8x1xf32> to vector<8x36xf32>
    %153 = arith.addf %150, %152 : vector<8x36xf32>
    %c0_139 = arith.constant 0 : index
    %c0_140 = arith.constant 0 : index
    %c0_141 = arith.constant 0 : index
    %c19_142 = arith.constant 19 : index
    %154 = vector.load %arg2[%c0_139, %c0_140, %c0_141, %c19_142] : memref<1x1x4x74xbf16, #tpu.memory_space<vmem>>, vector<1x1x4x36xbf16>
    %155 = vector.shape_cast %154 : vector<1x1x4x36xbf16> to vector<4x36xbf16>
    %c0_143 = arith.constant 0 : index
    %c0_144 = arith.constant 0 : index
    %156 = vector.load %arg11[%c0_143, %c0_144] : memref<8x4xbf16, #tpu.memory_space<vmem>>, vector<8x4xbf16>
    %cst_145 = arith.constant dense<0.000000e+00> : vector<8x36xf32>
    %157 = tpu.matmul %156, %155, %cst_145 {dimension_numbers = #tpu.dot_dimension_numbers<[1], [0], [0], [1], [0, 0, 1, 1], [], []>} : vector<8x4xbf16>, vector<4x36xbf16>, vector<8x36xf32> -> vector<8x36xf32>
    %158 = arith.addf %153, %157 : vector<8x36xf32>
    %c0_146 = arith.constant 0 : index
    %c0_147 = arith.constant 0 : index
    %c0_148 = arith.constant 0 : index
    %c0_149 = arith.constant 0 : index
    %159 = vector.load %arg12[%c0_146, %c0_147, %c0_148, %c0_149] : memref<1x1x8x36xf32, #tpu.memory_space<vmem>>, vector<1x1x8x36xf32>
    %160 = vector.shape_cast %159 : vector<1x1x8x36xf32> to vector<8x36xf32>
    %161 = vector.shape_cast %158 : vector<8x36xf32> to vector<1x1x8x36xf32>
    tpu.vector_store %arg12[%c0_146, %c0_147, %c0_148, %c0_149], %161 {strides = array<i32>} : memref<1x1x8x36xf32, #tpu.memory_space<vmem>>, vector<1x1x8x36xf32>,
    return
  }
  func.func @transform_0(%arg0: i32, %arg1: i32) -> (i32, i32, i32, i32) {
    %c0_i32 = arith.constant 0 : i32
    %c0_i32_0 = arith.constant 0 : i32
    %c0_i32_1 = arith.constant 0 : i32
    return %arg0, %arg1, %c0_i32, %c0_i32_0 : i32, i32, i32, i32
  }
  func.func @transform_1(%arg0: i32, %arg1: i32) -> (i32, i32, i32) {
    %c0_i32 = arith.constant 0 : i32
    %c0_i32_0 = arith.constant 0 : i32
    %c0_i32_1 = arith.constant 0 : i32
    %c0_i32_2 = arith.constant 0 : i32
    return %c0_i32, %c0_i32_0, %c0_i32_1 : i32, i32, i32
  }
  func.func @transform_2(%arg0: i32, %arg1: i32) -> (i32, i32) {
    %c0_i32 = arith.constant 0 : i32
    %c0_i32_0 = arith.constant 0 : i32
    %c0_i32_1 = arith.constant 0 : i32
    return %c0_i32, %c0_i32_0 : i32, i32
  }
  func.func @transform_3(%arg0: i32, %arg1: i32) -> (i32, i32) {
    %c0_i32 = arith.constant 0 : i32
    %c0_i32_0 = arith.constant 0 : i32
    %c0_i32_1 = arith.constant 0 : i32
    return %c0_i32, %c0_i32_0 : i32, i32
  }
  func.func @transform_4(%arg0: i32, %arg1: i32) -> (i32, i32) {
    %c0_i32 = arith.constant 0 : i32
    %c0_i32_0 = arith.constant 0 : i32
    %c0_i32_1 = arith.constant 0 : i32
    return %c0_i32, %c0_i32_0 : i32, i32
  }
  func.func @transform_5(%arg0: i32, %arg1: i32) -> (i32, i32, i32) {
    %c0_i32 = arith.constant 0 : i32
    %c0_i32_0 = arith.constant 0 : i32
    %c0_i32_1 = arith.constant 0 : i32
    %c0_i32_2 = arith.constant 0 : i32
    return %c0_i32, %c0_i32_0, %c0_i32_1 : i32, i32, i32
  }
  func.func @transform_6(%arg0: i32, %arg1: i32) -> (i32, i32) {
    %c0_i32 = arith.constant 0 : i32
    %c0_i32_0 = arith.constant 0 : i32
    %c0_i32_1 = arith.constant 0 : i32
    return %c0_i32, %c0_i32_0 : i32, i32
  }
  func.func @transform_7(%arg0: i32, %arg1: i32) -> (i32, i32) {
    %c0_i32 = arith.constant 0 : i32
    %c0_i32_0 = arith.constant 0 : i32
    %c0_i32_1 = arith.constant 0 : i32
    return %c0_i32, %c0_i32_0 : i32, i32
  }
  func.func @transform_8(%arg0: i32, %arg1: i32) -> (i32, i32) {
    %c0_i32 = arith.constant 0 : i32
    %c0_i32_0 = arith.constant 0 : i32
    %c0_i32_1 = arith.constant 0 : i32
    return %c0_i32, %c0_i32_0 : i32, i32
  }
  func.func @transform_9(%arg0: i32, %arg1: i32) -> (i32, i32) {
    %c0_i32 = arith.constant 0 : i32
    %c0_i32_0 = arith.constant 0 : i32
    %c0_i32_1 = arith.constant 0 : i32
    return %c0_i32, %c0_i32_0 : i32, i32
  }
  func.func @transform_10(%arg0: i32, %arg1: i32) -> (i32, i32, i32, i32) {
    %c0_i32 = arith.constant 0 : i32
    %c0_i32_0 = arith.constant 0 : i32
    %c0_i32_1 = arith.constant 0 : i32
    return %arg0, %arg1, %c0_i32, %c0_i32_0 : i32, i32, i32, i32
  }
}

</mosaic_0001>

<llo_original>
// kernel: tpu_custom_call.1
$region0: #{tpu_custom_call.1}
  #allocation0 [shape = 'u32[]', space=smem, size = 0x4, offset = 0x4, fixed_abs, tag = 'smem constant byte address 0x4 - core index']
  #allocation1 [shape = 'u32[144,128]{1,0:T(1,128)}', space=vmem, size = 0x12000, scoped, tag = 'internal scratch']
  #allocation2 [shape = 'bf16[8,56]{1,0:T(8,128)(2,1)}', space=vmem, size = 0x800, scoped, tag = 'scratch operand']
  %s0 = inlined_call_operand.vmem [shape: bf16[2,2,4,74], index: 0, kind: input, shape index: {}]
  %s1 = inlined_call_operand.vmem [shape: bf16[9,8,4], index: 1, kind: input, shape index: {}]
  %s2 = inlined_call_operand.vmem [shape: f32[8,1], index: 2, kind: input, shape index: {}]
  %s3 = inlined_call_operand.vmem [shape: f32[8,1], index: 3, kind: input, shape index: {}]
  %s4 = inlined_call_operand.vmem [shape: f32[8,1], index: 4, kind: input, shape index: {}]
  %s5 = inlined_call_operand.vmem [shape: bf16[9,8,8], index: 5, kind: input, shape index: {}]
  %s6 = inlined_call_operand.vmem [shape: f32[8,1], index: 6, kind: input, shape index: {}]
  %s7 = inlined_call_operand.vmem [shape: f32[8,1], index: 7, kind: input, shape index: {}]
  %s8 = inlined_call_operand.vmem [shape: f32[8,1], index: 8, kind: input, shape index: {}]
  %s9 = inlined_call_operand.vmem [shape: bf16[8,4], index: 9, kind: input, shape index: {}]
  %s10 = inlined_call_operand.hbm [shape: f32[2,2,8,36], index: 10, kind: output, shape index: {}]
  %s11 = sld [smem:[#allocation0]]
  $region81: #{tpu_custom_call.1} parent=0
    _
  %s13 = ssub.s32 1, %s11
  %s14 = scalar_select 0, %s13, %s11
  $region1: #{tpu_custom_call.1} parent=0
    #allocation3 [shape = 'u8[8192]{0}', space=vmem, size = 0x2000, scoped, tag = 'output window, operand 0']
    #allocation4 [shape = 's32[2]{0}', space=sflag, size = 0x8, scoped, tag = 'scoped memory for tpu_custom_call.1']
    %15 = vsyncpa [#allocation4], 0
    %s16 = scalar_lea.sflag [#allocation4], 1
    %17 = vsyncpa %s16, 0
    loop: start=0, step=1, limit=6
    $region2: #{tpu_custom_call.1} parent=1 // loop_pre_header
      _
    $region3: #{tpu_custom_call.1} parent=1 // loop_header
      %s19 = sphi 0, %s23
      %p20 = scmp.ge.s32.totalorder %s19, 6
      %s26 = sphi 0, %s38
      %s27 = sphi 0, %s34
      %s28 = sphi 0, %s26
      %s29 = sphi 0, %s27
      %s30 = sphi 0, %s28
      %s31 = sphi 0, %s29
      %s43 = sphi 0, %s45
      %s46 = sphi 0, %s43
      %s47 = sphi 0, %s46
      %s63 = sphi 0, %s47
      %s67 = sphi 0, %s67
      %s69 = sphi 0, %s67
      %s70 = sphi 0, %s69
      %s84 = sphi 0, %s70
      %s88 = sphi 0, %s88
      %s90 = sphi 0, %s88
      %s91 = sphi 0, %s90
      %s105 = sphi 0, %s91
      %s109 = sphi 0, %s109
      %s111 = sphi 0, %s109
      %s112 = sphi 0, %s111
      %s126 = sphi 0, %s112
      %s130 = sphi 0, %s130
      %s132 = sphi 0, %s130
      %s133 = sphi 0, %s132
      %s147 = sphi 0, %s133
      %s151 = sphi 0, %s151
      %s153 = sphi 0, %s151
      %s154 = sphi 0, %s153
      %s168 = sphi 0, %s154
      %s172 = sphi 0, %s172
      %s174 = sphi 0, %s172
      %s175 = sphi 0, %s174
      %s189 = sphi 0, %s175
      %s193 = sphi 0, %s193
      %s195 = sphi 0, %s193
      %s196 = sphi 0, %s195
      %s210 = sphi 0, %s196
      %s214 = sphi 0, %s214
      %s216 = sphi 0, %s214
      %s217 = sphi 0, %s216
      %s231 = sphi 0, %s217
      %s235 = sphi 0, %s235
      %s237 = sphi 0, %s235
      %s238 = sphi 0, %s237
      %s252 = sphi 0, %s238
      %s260 = sphi 0, %s262
      %s263 = sphi 0, %s260
      %s264 = sphi 0, %s263
      %s280 = sphi 0, %s264
    $region4: #{tpu_custom_call.1} parent=1 // loop_header_branch
      %22 = sbr.rel (%p20) target = $region8
    $region5: #{tpu_custom_call.1} parent=1 // loop_body
      %s24 = ssub.s32 %s19, 1
      %s25 = ssub.s32 %s19, 2
      %s32 = sadd.s32 1, %s27
      %p33 = scmp.ge.s32.totalorder %s32, 2
      %s34 = scalar_select %p33, 0, %s32
      %s35 = sadd.s32 1, %s26
      %s36 = scalar_select %p33, %s35, %s26
      %p37 = scmp.ge.s32.totalorder %s36, 2
      %s38 = scalar_select %p37, 0, %s36
      %s39 = ssub.s32 %s26, %s38
      %s40 = ssub.s32 %s27, %s34
      %s41 = sor.u32 %s39, %s40
      %p42 = scmp.eq.s32.totalorder %s41, 0
      %s44 = sadd.s32 %s43, 1
      %s45 = scalar_select %p42, %s43, %s44
      %p48 = pneg %p42
      %p49 = scmp.eq.s32.totalorder %s19, 3
      %p50 = por %p48, %p49
      %p51 = scmp.ne.s32.totalorder %s43, %s46
      %p52 = scmp.eq.s32.totalorder %s19, 0
      %p53 = por %p51, %p52
      %p54 = scmp.ne.s32.totalorder %s43, %s46
      %p55 = scmp.eq.s32.totalorder %s24, 3
      %p56 = por %p54, %p55
      %p57 = scmp.ne.s32.totalorder %s46, %s47
      %p58 = scmp.eq.s32.totalorder %s24, 0
      %p59 = por %p57, %p58
      %p60 = scmp.ne.s32.totalorder %s46, %s47
      %p61 = scmp.eq.s32.totalorder %s25, 3
      %p62 = por %p60, %p61
      %p64 = scmp.ne.s32.totalorder %s47, %s63
      %p65 = scmp.eq.s32.totalorder %s25, 0
      %p66 = por %p64, %p65
      %s68 = sadd.s32 %s67, 1
      %p71 = scmp.eq.s32.totalorder %s19, 3
      %p72 = scmp.ne.s32.totalorder %s67, %s69
      %p73 = scmp.eq.s32.totalorder %s19, 0
      %p74 = por %p72, %p73
      %p75 = scmp.ne.s32.totalorder %s67, %s69
      %p76 = scmp.eq.s32.totalorder %s24, 3
      %p77 = por %p75, %p76
      %p78 = scmp.ne.s32.totalorder %s69, %s70
      %p79 = scmp.eq.s32.totalorder %s24, 0
      %p80 = por %p78, %p79
      %p81 = scmp.ne.s32.totalorder %s69, %s70
      %p82 = scmp.eq.s32.totalorder %s25, 3
      %p83 = por %p81, %p82
      %p85 = scmp.ne.s32.totalorder %s70, %s84
      %p86 = scmp.eq.s32.totalorder %s25, 0
      %p87 = por %p85, %p86
      %s89 = sadd.s32 %s88, 1
      %p92 = scmp.eq.s32.totalorder %s19, 3
      %p93 = scmp.ne.s32.totalorder %s88, %s90
      %p94 = scmp.eq.s32.totalorder %s19, 0
      %p95 = por %p93, %p94
      %p96 = scmp.ne.s32.totalorder %s88, %s90
      %p97 = scmp.eq.s32.totalorder %s24, 3
      %p98 = por %p96, %p97
      %p99 = scmp.ne.s32.totalorder %s90, %s91
      %p100 = scmp.eq.s32.totalorder %s24, 0
      %p101 = por %p99, %p100
      %p102 = scmp.ne.s32.totalorder %s90, %s91
      %p103 = scmp.eq.s32.totalorder %s25, 3
      %p104 = por %p102, %p103
      %p106 = scmp.ne.s32.totalorder %s91, %s105
      %p107 = scmp.eq.s32.totalorder %s25, 0
      %p108 = por %p106, %p107
      %s110 = sadd.s32 %s109, 1
      %p113 = scmp.eq.s32.totalorder %s19, 3
      %p114 = scmp.ne.s32.totalorder %s109, %s111
      %p115 = scmp.eq.s32.totalorder %s19, 0
      %p116 = por %p114, %p115
      %p117 = scmp.ne.s32.totalorder %s109, %s111
      %p118 = scmp.eq.s32.totalorder %s24, 3
      %p119 = por %p117, %p118
      %p120 = scmp.ne.s32.totalorder %s111, %s112
      %p121 = scmp.eq.s32.totalorder %s24, 0
      %p122 = por %p120, %p121
      %p123 = scmp.ne.s32.totalorder %s111, %s112
      %p124 = scmp.eq.s32.totalorder %s25, 3
      %p125 = por %p123, %p124
      %p127 = scmp.ne.s32.totalorder %s112, %s126
      %p128 = scmp.eq.s32.totalorder %s25, 0
      %p129 = por %p127, %p128
      %s131 = sadd.s32 %s130, 1
      %p134 = scmp.eq.s32.totalorder %s19, 3
      %p135 = scmp.ne.s32.totalorder %s130, %s132
      %p136 = scmp.eq.s32.totalorder %s19, 0
      %p137 = por %p135, %p136
      %p138 = scmp.ne.s32.totalorder %s130, %s132
      %p139 = scmp.eq.s32.totalorder %s24, 3
      %p140 = por %p138, %p139
      %p141 = scmp.ne.s32.totalorder %s132, %s133
      %p142 = scmp.eq.s32.totalorder %s24, 0
      %p143 = por %p141, %p142
      %p144 = scmp.ne.s32.totalorder %s132, %s133
      %p145 = scmp.eq.s32.totalorder %s25, 3
      %p146 = por %p144, %p145
      %p148 = scmp.ne.s32.totalorder %s133, %s147
      %p149 = scmp.eq.s32.totalorder %s25, 0
      %p150 = por %p148, %p149
      %s152 = sadd.s32 %s151, 1
      %p155 = scmp.eq.s32.totalorder %s19, 3
      %p156 = scmp.ne.s32.totalorder %s151, %s153
      %p157 = scmp.eq.s32.totalorder %s19, 0
      %p158 = por %p156, %p157
      %p159 = scmp.ne.s32.totalorder %s151, %s153
      %p160 = scmp.eq.s32.totalorder %s24, 3
      %p161 = por %p159, %p160
      %p162 = scmp.ne.s32.totalorder %s153, %s154
      %p163 = scmp.eq.s32.totalorder %s24, 0
      %p164 = por %p162, %p163
      %p165 = scmp.ne.s32.totalorder %s153, %s154
      %p166 = scmp.eq.s32.totalorder %s25, 3
      %p167 = por %p165, %p166
      %p169 = scmp.ne.s32.totalorder %s154, %s168
      %p170 = scmp.eq.s32.totalorder %s25, 0
      %p171 = por %p169, %p170
      %s173 = sadd.s32 %s172, 1
      %p176 = scmp.eq.s32.totalorder %s19, 3
      %p177 = scmp.ne.s32.totalorder %s172, %s174
      %p178 = scmp.eq.s32.totalorder %s19, 0
      %p179 = por %p177, %p178
      %p180 = scmp.ne.s32.totalorder %s172, %s174
      %p181 = scmp.eq.s32.totalorder %s24, 3
      %p182 = por %p180, %p181
      %p183 = scmp.ne.s32.totalorder %s174, %s175
      %p184 = scmp.eq.s32.totalorder %s24, 0
      %p185 = por %p183, %p184
      %p186 = scmp.ne.s32.totalorder %s174, %s175
      %p187 = scmp.eq.s32.totalorder %s25, 3
      %p188 = por %p186, %p187
      %p190 = scmp.ne.s32.totalorder %s175, %s189
      %p191 = scmp.eq.s32.totalorder %s25, 0
      %p192 = por %p190, %p191
      %s194 = sadd.s32 %s193, 1
      %p197 = scmp.eq.s32.totalorder %s19, 3
      %p198 = scmp.ne.s32.totalorder %s193, %s195
      %p199 = scmp.eq.s32.totalorder %s19, 0
      %p200 = por %p198, %p199
      %p201 = scmp.ne.s32.totalorder %s193, %s195
      %p202 = scmp.eq.s32.totalorder %s24, 3
      %p203 = por %p201, %p202
      %p204 = scmp.ne.s32.totalorder %s195, %s196
      %p205 = scmp.eq.s32.totalorder %s24, 0
      %p206 = por %p204, %p205
      %p207 = scmp.ne.s32.totalorder %s195, %s196
      %p208 = scmp.eq.s32.totalorder %s25, 3
      %p209 = por %p207, %p208
      %p211 = scmp.ne.s32.totalorder %s196, %s210
      %p212 = scmp.eq.s32.totalorder %s25, 0
      %p213 = por %p211, %p212
      %s215 = sadd.s32 %s214, 1
      %p218 = scmp.eq.s32.totalorder %s19, 3
      %p219 = scmp.ne.s32.totalorder %s214, %s216
      %p220 = scmp.eq.s32.totalorder %s19, 0
      %p221 = por %p219, %p220
      %p222 = scmp.ne.s32.totalorder %s214, %s216
      %p223 = scmp.eq.s32.totalorder %s24, 3
      %p224 = por %p222, %p223
      %p225 = scmp.ne.s32.totalorder %s216, %s217
      %p226 = scmp.eq.s32.totalorder %s24, 0
      %p227 = por %p225, %p226
      %p228 = scmp.ne.s32.totalorder %s216, %s217
      %p229 = scmp.eq.s32.totalorder %s25, 3
      %p230 = por %p228, %p229
      %p232 = scmp.ne.s32.totalorder %s217, %s231
      %p233 = scmp.eq.s32.totalorder %s25, 0
      %p234 = por %p232, %p233
      %s236 = sadd.s32 %s235, 1
      %p239 = scmp.eq.s32.totalorder %s19, 3
      %p240 = scmp.ne.s32.totalorder %s235, %s237
      %p241 = scmp.eq.s32.totalorder %s19, 0
      %p242 = por %p240, %p241
      %p243 = scmp.ne.s32.totalorder %s235, %s237
      %p244 = scmp.eq.s32.totalorder %s24, 3
      %p245 = por %p243, %p244
      %p246 = scmp.ne.s32.totalorder %s237, %s238
      %p247 = scmp.eq.s32.totalorder %s24, 0
      %p248 = por %p246, %p247
      %p249 = scmp.ne.s32.totalorder %s237, %s238
      %p250 = scmp.eq.s32.totalorder %s25, 3
      %p251 = por %p249, %p250
      %p253 = scmp.ne.s32.totalorder %s238, %s252
      %p254 = scmp.eq.s32.totalorder %s25, 0
      %p255 = por %p253, %p254
      %s256 = ssub.s32 %s26, %s38
      %s257 = ssub.s32 %s27, %s34
      %s258 = sor.u32 %s256, %s257
      %p259 = scmp.eq.s32.totalorder %s258, 0
      %s261 = sadd.s32 %s260, 1
      %s262 = scalar_select %p259, %s260, %s261
      %p265 = pneg %p259
      %p266 = scmp.eq.s32.totalorder %s19, 3
      %p267 = por %p265, %p266
      %p268 = scmp.ne.s32.totalorder %s260, %s263
      %p269 = scmp.eq.s32.totalorder %s19, 0
      %p270 = por %p268, %p269
      %p271 = scmp.ne.s32.totalorder %s260, %s263
      %p272 = scmp.eq.s32.totalorder %s24, 3
      %p273 = por %p271, %p272
      %p274 = scmp.ne.s32.totalorder %s263, %s264
      %p275 = scmp.eq.s32.totalorder %s24, 0
      %p276 = por %p274, %p275
      %p277 = scmp.ne.s32.totalorder %s263, %s264
      %p278 = scmp.eq.s32.totalorder %s25, 3
      %p279 = por %p277, %p278
      %p281 = scmp.ne.s32.totalorder %s264, %s280
      %p282 = scmp.eq.s32.totalorder %s25, 0
      %p283 = por %p281, %p282
      %p284 = scmp.le.s32.totalorder 1, %s19
      %p285 = scmp.lt.s32.totalorder %s19, 5
      %p286 = pnand %p284, %p285
      %p287 = pneg %p286
      // Predicated region
      $region9: #{tpu_custom_call.1} parent=5 // pred_check
        _
      $region10: #{tpu_custom_call.1} parent=5 // pred_check_branch
        %289 = sbr.rel (%p286) target = $region12
      $region11: #{tpu_custom_call.1} parent=5 // pred_region
        %s290 = ssub.s32 %s19, 1
        // Predicated region
        $region13: #{tpu_custom_call.1} parent=11 // pred_check
          %p291 = pneg %p80
        $region14: #{tpu_custom_call.1} parent=11 // pred_check_branch
          %293 = sbr.rel (%p291) target = $region16
        $region15: #{tpu_custom_call.1} parent=11 // pred_region
          _
        $region16: #{tpu_custom_call.1} parent=11 // pred_fallthru
          _
        // Predicated region
        $region17: #{tpu_custom_call.1} parent=11 // pred_check
          %p294 = pneg %p101
        $region18: #{tpu_custom_call.1} parent=11 // pred_check_branch
          %296 = sbr.rel (%p294) target = $region20
        $region19: #{tpu_custom_call.1} parent=11 // pred_region
          _
        $region20: #{tpu_custom_call.1} parent=11 // pred_fallthru
          _
        // Predicated region
        $region21: #{tpu_custom_call.1} parent=11 // pred_check
          %p297 = pneg %p122
        $region22: #{tpu_custom_call.1} parent=11 // pred_check_branch
          %299 = sbr.rel (%p297) target = $region24
        $region23: #{tpu_custom_call.1} parent=11 // pred_region
          _
        $region24: #{tpu_custom_call.1} parent=11 // pred_fallthru
          _
        // Predicated region
        $region25: #{tpu_custom_call.1} parent=11 // pred_check
          %p300 = pneg %p143
        $region26: #{tpu_custom_call.1} parent=11 // pred_check_branch
          %302 = sbr.rel (%p300) target = $region28
        $region27: #{tpu_custom_call.1} parent=11 // pred_region
          _
        $region28: #{tpu_custom_call.1} parent=11 // pred_fallthru
          _
        // Predicated region
        $region29: #{tpu_custom_call.1} parent=11 // pred_check
          %p303 = pneg %p164
        $region30: #{tpu_custom_call.1} parent=11 // pred_check_branch
          %305 = sbr.rel (%p303) target = $region32
        $region31: #{tpu_custom_call.1} parent=11 // pred_region
          _
        $region32: #{tpu_custom_call.1} parent=11 // pred_fallthru
          _
        // Predicated region
        $region33: #{tpu_custom_call.1} parent=11 // pred_check
          %p306 = pneg %p185
        $region34: #{tpu_custom_call.1} parent=11 // pred_check_branch
          %308 = sbr.rel (%p306) target = $region36
        $region35: #{tpu_custom_call.1} parent=11 // pred_region
          _
        $region36: #{tpu_custom_call.1} parent=11 // pred_fallthru
          _
        // Predicated region
        $region37: #{tpu_custom_call.1} parent=11 // pred_check
          %p309 = pneg %p206
        $region38: #{tpu_custom_call.1} parent=11 // pred_check_branch
          %311 = sbr.rel (%p309) target = $region40
        $region39: #{tpu_custom_call.1} parent=11 // pred_region
          _
        $region40: #{tpu_custom_call.1} parent=11 // pred_fallthru
          _
        // Predicated region
        $region41: #{tpu_custom_call.1} parent=11 // pred_check
          %p312 = pneg %p227
        $region42: #{tpu_custom_call.1} parent=11 // pred_check_branch
          %314 = sbr.rel (%p312) target = $region44
        $region43: #{tpu_custom_call.1} parent=11 // pred_region
          _
        $region44: #{tpu_custom_call.1} parent=11 // pred_fallthru
          _
        // Predicated region
        $region45: #{tpu_custom_call.1} parent=11 // pred_check
          %p315 = pneg %p248
        $region46: #{tpu_custom_call.1} parent=11 // pred_check_branch
          %317 = sbr.rel (%p315) target = $region48
        $region47: #{tpu_custom_call.1} parent=11 // pred_region
          _
        $region48: #{tpu_custom_call.1} parent=11 // pred_fallthru
          _
      $region12: #{tpu_custom_call.1} parent=5 // pred_fallthru
        _
      %p318 = scmp.lt.s32.totalorder %s19, 4
      // Predicated region
      $region49: #{tpu_custom_call.1} parent=5 // pred_check
        %p319 = pneg %p318
      $region50: #{tpu_custom_call.1} parent=5 // pred_check_branch
        %321 = sbr.rel (%p319) target = $region52
      $region51: #{tpu_custom_call.1} parent=5 // pred_region
        // Predicated region
        $region53: #{tpu_custom_call.1} parent=51 // pred_check
          %p322 = pneg %p53
        $region54: #{tpu_custom_call.1} parent=51 // pred_check_branch
          %324 = sbr.rel (%p322) target = $region56
        $region55: #{tpu_custom_call.1} parent=51 // pred_region
          %p325 = scmp.lt.s32.totalorder %s26, 1
          %s326 = scalar_select %p325, %s26, 1
          %p327 = scmp.lt.s32.totalorder %s27, 1
          %s328 = scalar_select %p327, %s27, 1
          %s329 = smul.addr %s326, 2
          %s330 = sadd.s32 %s328, %s329
          %s331 = smul.addr %s330, 2
          %s332 = scalar_lea.vmem %s0, %s331
        $region56: #{tpu_custom_call.1} parent=51 // pred_fallthru
          _
      $region52: #{tpu_custom_call.1} parent=5 // pred_fallthru
        _
      %p333 = scmp.le.s32.totalorder 1, %s19
      %p334 = scmp.lt.s32.totalorder %s19, 5
      %p335 = pnand %p333, %p334
      %p336 = pneg %p335
      // Predicated region
      $region57: #{tpu_custom_call.1} parent=5 // pred_check
        _
      $region58: #{tpu_custom_call.1} parent=5 // pred_check_branch
        %338 = sbr.rel (%p335) target = $region60
      $region59: #{tpu_custom_call.1} parent=5 // pred_region
        %s339 = ssub.s32 %s19, 1
        %p340 = scmp.lt.s32.totalorder %s28, 1
        %s341 = scalar_select %p340, %s28, 1
        %p342 = scmp.lt.s32.totalorder %s29, 1
        %s343 = scalar_select %p342, %s29, 1
        %s344 = smul.addr %s341, 2
        %s345 = sadd.s32 %s343, %s344
        %s346 = smul.addr %s345, 2
        %s347 = scalar_lea.vmem %s0, %s346
        %p348 = pneg %p59
        %p349 = pneg %p56
        %p350 = pneg %p80
        %p351 = pneg %p77
        %p352 = pneg %p101
        %p353 = pneg %p98
        %p354 = pneg %p122
        %p355 = pneg %p119
        %p356 = pneg %p143
        %p357 = pneg %p140
        %p358 = pneg %p164
        %p359 = pneg %p161
        %p360 = pneg %p185
        %p361 = pneg %p182
        %p362 = pneg %p206
        %p363 = pneg %p203
        %p364 = pneg %p227
        %p365 = pneg %p224
        %p366 = pneg %p248
        %p367 = pneg %p245
        %p368 = pneg %p276
        %p369 = pneg %p273
        %s370 = sand.u32 %s263, 1
        %s371 = scalar_lea.sflag [#allocation4], %s370
        %s372 = sand.u32 %s263, 1
        %s373 = smul.addr %s372, 8
        %s374 = scalar_lea.vmem [#allocation3], %s373
        %p375 = scmp.lt.s32.totalorder %s28, 1
        %s376 = scalar_select %p375, %s28, 1
        %p377 = scmp.lt.s32.totalorder %s29, 1
        %s378 = scalar_select %p377, %s29, 1
        %s379 = smul.addr %s376, 2
        %s380 = sadd.s32 %s378, %s379
        %s381 = smul.addr %s380, 2
        %s382 = scalar_lea.vmem %s0, %s381
        %v384 = vld [vmem:[%s382] sm:$0x3]
        %v385 = vld [vmem:[%s1] sm:$0xf]
        %s386 = scalar_lea.vmem %s1, 4
        %v387 = vld [vmem:[%s386] sm:$0xf]
        %v390 = vunpack.c.l.s4 1983009808
        %v391 = vunpack.c.0.s8 %v390
        %v392 = vlaneseq
        %v393 = vshrl.u32 %v392, 7
        %v394 = vsub.s32 %v391, %v393
        %v395 = vrot.slane %v384, %v394
        %396 = vrot.lane.b32.xlu0 %v395, 127
        %v397 = vpop.permute.xlu0 %396
        %vm398 = vcmask 31744
        %v400 = vsel %vm398, %v387, 0
        %vm402 = vcmask 1041408
        %v404 = vsel %vm402, %v397, 0
        %406 = vmatprep.subr.bf16.mxu0 0
        %407 = vmatpush1.bf16.msra.mxu0 %v404
        %408 = vmatprep.subr.bf16.mxu0 0
        %409 = vmatpush1.bf16.msra.mxu0 0
        %410 = vmatprep.subr.bf16.mxu0 0
        %411 = vmatpush1.bf16.msra.mxu0 0
        %412 = vmatprep.subr.bf16.mxu0 0
        %413 = vmatpush1.bf16.msra.mxu0 0
        %414 = vmatprep.subr.bf16.mxu0 0
        %415 = vmatpush1.bf16.msra.mxu0 0
        %416 = vmatprep.subr.bf16.mxu0 0
        %417 = vmatpush1.bf16.msra.mxu0 0
        %418 = vmatprep.subr.bf16.mxu0 0
        %419 = vmatpush1.bf16.msra.mxu0 0
        %420 = vmatprep.subr.bf16.mxu0 0
        %421 = vmatpush1.bf16.msra.mxu0 0
        %422 = vmatprep.subr.bf16.mxu0 0
        %423 = vmatpush1.bf16.msra.mxu0 0
        %424 = vmatprep.subr.bf16.mxu0 0
        %425 = vmatpush1.bf16.msra.mxu0 0
        %426 = vmatprep.subr.bf16.mxu0 0
        %427 = vmatpush1.bf16.msra.mxu0 0
        %428 = vmatprep.subr.bf16.mxu0 0
        %429 = vmatpush1.bf16.msra.mxu0 0
        %430 = vmatprep.subr.bf16.mxu0 0
        %431 = vmatpush1.bf16.msra.mxu0 0
        %432 = vmatprep.subr.bf16.mxu0 0
        %433 = vmatpush1.bf16.msra.mxu0 0
        %434 = vmatprep.subr.bf16.mxu0 0
        %435 = vmatpush1.bf16.msra.mxu0 0
        %436 = vmatprep.subr.bf16.mxu0 0
        %437 = vmatpush1.bf16.msra.mxu0 0
        %438 = vmatprep.mubr.bf16.mxu0 0
        %439 = vmatmul.mubr.bf16.gmra.mrb[0].mxu0 %v400
        %v440 = vpop.f32.mrb[0].mxu0
        %v441 = vadd.f32 0.0, %v440
        %v442 = vpop.f32.mrb[0].mxu0
        %v443 = vpop.f32.mrb[0].mxu0
        %v444 = vpop.f32.mrb[0].mxu0
        %445 = vdwg.mxu0
        %v447 = vsel %vm398, %v385, 0
        %v450 = vsel %vm402, %v384, 0
        %452 = vmatprep.subr.bf16.mxu0 0
        %453 = vmatpush1.bf16.msra.mxu0 %v450
        %454 = vmatprep.subr.bf16.mxu0 0
        %455 = vmatpush1.bf16.msra.mxu0 0
        %456 = vmatprep.subr.bf16.mxu0 0
        %457 = vmatpush1.bf16.msra.mxu0 0
        %458 = vmatprep.subr.bf16.mxu0 0
        %459 = vmatpush1.bf16.msra.mxu0 0
        %460 = vmatprep.subr.bf16.mxu0 0
        %461 = vmatpush1.bf16.msra.mxu0 0
        %462 = vmatprep.subr.bf16.mxu0 0
        %463 = vmatpush1.bf16.msra.mxu0 0
        %464 = vmatprep.subr.bf16.mxu0 0
        %465 = vmatpush1.bf16.msra.mxu0 0
        %466 = vmatprep.subr.bf16.mxu0 0
        %467 = vmatpush1.bf16.msra.mxu0 0
        %468 = vmatprep.subr.bf16.mxu0 0
        %469 = vmatpush1.bf16.msra.mxu0 0
        %470 = vmatprep.subr.bf16.mxu0 0
        %471 = vmatpush1.bf16.msra.mxu0 0
        %472 = vmatprep.subr.bf16.mxu0 0
        %473 = vmatpush1.bf16.msra.mxu0 0
        %474 = vmatprep.subr.bf16.mxu0 0
        %475 = vmatpush1.bf16.msra.mxu0 0
        %476 = vmatprep.subr.bf16.mxu0 0
        %477 = vmatpush1.bf16.msra.mxu0 0
        %478 = vmatprep.subr.bf16.mxu0 0
        %479 = vmatpush1.bf16.msra.mxu0 0
        %480 = vmatprep.subr.bf16.mxu0 0
        %481 = vmatpush1.bf16.msra.mxu0 0
        %482 = vmatprep.subr.bf16.mxu0 0
        %483 = vmatpush1.bf16.msra.mxu0 0
        %484 = vmatprep.mubr.bf16.mxu0 0
        %485 = vmatmul.mubr.bf16.gmra.mrb[0].mxu0 %v447
        %v486 = vpop.f32.mrb[0].mxu0
        %v487 = vadd.f32 %v441, %v486
        %v488 = vpop.f32.mrb[0].mxu0
        %v489 = vpop.f32.mrb[0].mxu0
        %v490 = vpop.f32.mrb[0].mxu0
        %491 = vdwg.mxu0
        %v492 = vld [vmem:[%s382] sm:$0x3]
        %s493 = scalar_lea.vmem %s1, 8
        %v494 = vld [vmem:[%s493] sm:$0xf]
        %v497 = vunpack.c.l.s4 1983009808
        %v498 = vunpack.c.0.s8 %v497
        %v499 = vlaneseq
        %v500 = vshrl.u32 %v499, 7
        %v501 = vsub.s32 %v498, %v500
        %v502 = vrot.slane %v492, %v501
        %503 = vrot.lane.b32.xlu0 %v502, 126
        %v504 = vpop.permute.xlu0 %503
        %v506 = vsel %vm398, %v494, 0
        %v509 = vsel %vm402, %v504, 0
        %511 = vmatprep.subr.bf16.mxu0 0
        %512 = vmatpush1.bf16.msra.mxu0 %v509
        %513 = vmatprep.subr.bf16.mxu0 0
        %514 = vmatpush1.bf16.msra.mxu0 0
        %515 = vmatprep.subr.bf16.mxu0 0
        %516 = vmatpush1.bf16.msra.mxu0 0
        %517 = vmatprep.subr.bf16.mxu0 0
        %518 = vmatpush1.bf16.msra.mxu0 0
        %519 = vmatprep.subr.bf16.mxu0 0
        %520 = vmatpush1.bf16.msra.mxu0 0
        %521 = vmatprep.subr.bf16.mxu0 0
        %522 = vmatpush1.bf16.msra.mxu0 0
        %523 = vmatprep.subr.bf16.mxu0 0
        %524 = vmatpush1.bf16.msra.mxu0 0
        %525 = vmatprep.subr.bf16.mxu0 0
        %526 = vmatpush1.bf16.msra.mxu0 0
        %527 = vmatprep.subr.bf16.mxu0 0
        %528 = vmatpush1.bf16.msra.mxu0 0
        %529 = vmatprep.subr.bf16.mxu0 0
        %530 = vmatpush1.bf16.msra.mxu0 0
        %531 = vmatprep.subr.bf16.mxu0 0
        %532 = vmatpush1.bf16.msra.mxu0 0
        %533 = vmatprep.subr.bf16.mxu0 0
        %534 = vmatpush1.bf16.msra.mxu0 0
        %535 = vmatprep.subr.bf16.mxu0 0
        %536 = vmatpush1.bf16.msra.mxu0 0
        %537 = vmatprep.subr.bf16.mxu0 0
        %538 = vmatpush1.bf16.msra.mxu0 0
        %539 = vmatprep.subr.bf16.mxu0 0
        %540 = vmatpush1.bf16.msra.mxu0 0
        %541 = vmatprep.subr.bf16.mxu0 0
        %542 = vmatpush1.bf16.msra.mxu0 0
        %543 = vmatprep.mubr.bf16.mxu0 0
        %544 = vmatmul.mubr.bf16.gmra.mrb[0].mxu0 %v506
        %v545 = vpop.f32.mrb[0].mxu0
        %v546 = vadd.f32 0.0, %v545
        %v547 = vpop.f32.mrb[0].mxu0
        %v548 = vpop.f32.mrb[0].mxu0
        %v549 = vpop.f32.mrb[0].mxu0
        %550 = vdwg.mxu0
        %v551 = vadd.f32 %v487, %v546
        %v552 = vld [vmem:[%s382] sm:$0x3]
        %s553 = scalar_lea.vmem %s1, 12
        %v554 = vld [vmem:[%s553] sm:$0xf]
        %v557 = vunpack.c.l.s4 1983009808
        %v558 = vunpack.c.0.s8 %v557
        %v559 = vlaneseq
        %v560 = vshrl.u32 %v559, 7
        %v561 = vsub.s32 %v558, %v560
        %v562 = vrot.slane %v552, %v561
        %563 = vrot.lane.b32.xlu0 %v562, 119
        %v564 = vpop.permute.xlu0 %563
        %v566 = vsel %vm398, %v554, 0
        %v569 = vsel %vm402, %v564, 0
        %571 = vmatprep.subr.bf16.mxu0 0
        %572 = vmatpush1.bf16.msra.mxu0 %v569
        %573 = vmatprep.subr.bf16.mxu0 0
        %574 = vmatpush1.bf16.msra.mxu0 0
        %575 = vmatprep.subr.bf16.mxu0 0
        %576 = vmatpush1.bf16.msra.mxu0 0
        %577 = vmatprep.subr.bf16.mxu0 0
        %578 = vmatpush1.bf16.msra.mxu0 0
        %579 = vmatprep.subr.bf16.mxu0 0
        %580 = vmatpush1.bf16.msra.mxu0 0
        %581 = vmatprep.subr.bf16.mxu0 0
        %582 = vmatpush1.bf16.msra.mxu0 0
        %583 = vmatprep.subr.bf16.mxu0 0
        %584 = vmatpush1.bf16.msra.mxu0 0
        %585 = vmatprep.subr.bf16.mxu0 0
        %586 = vmatpush1.bf16.msra.mxu0 0
        %587 = vmatprep.subr.bf16.mxu0 0
        %588 = vmatpush1.bf16.msra.mxu0 0
        %589 = vmatprep.subr.bf16.mxu0 0
        %590 = vmatpush1.bf16.msra.mxu0 0
        %591 = vmatprep.subr.bf16.mxu0 0
        %592 = vmatpush1.bf16.msra.mxu0 0
        %593 = vmatprep.subr.bf16.mxu0 0
        %594 = vmatpush1.bf16.msra.mxu0 0
        %595 = vmatprep.subr.bf16.mxu0 0
        %596 = vmatpush1.bf16.msra.mxu0 0
        %597 = vmatprep.subr.bf16.mxu0 0
        %598 = vmatpush1.bf16.msra.mxu0 0
        %599 = vmatprep.subr.bf16.mxu0 0
        %600 = vmatpush1.bf16.msra.mxu0 0
        %601 = vmatprep.subr.bf16.mxu0 0
        %602 = vmatpush1.bf16.msra.mxu0 0
        %603 = vmatprep.mubr.bf16.mxu0 0
        %604 = vmatmul.mubr.bf16.gmra.mrb[0].mxu0 %v566
        %v605 = vpop.f32.mrb[0].mxu0
        %v606 = vadd.f32 0.0, %v605
        %v607 = vpop.f32.mrb[0].mxu0
        %v608 = vpop.f32.mrb[0].mxu0
        %v609 = vpop.f32.mrb[0].mxu0
        %610 = vdwg.mxu0
        %v611 = vadd.f32 %v551, %v606
        %v612 = vld [vmem:[%s382] sm:$0x3]
        %s613 = scalar_lea.vmem %s1, 16
        %v614 = vld [vmem:[%s613] sm:$0xf]
        %v617 = vunpack.c.l.s4 1983009808
        %v618 = vunpack.c.0.s8 %v617
        %v619 = vlaneseq
        %v620 = vshrl.u32 %v619, 7
        %v621 = vsub.s32 %v618, %v620
        %v622 = vrot.slane %v612, %v621
        %623 = vrot.lane.b32.xlu0 %v622, 118
        %v624 = vpop.permute.xlu0 %623
        %v626 = vsel %vm398, %v614, 0
        %v629 = vsel %vm402, %v624, 0
        %631 = vmatprep.subr.bf16.mxu0 0
        %632 = vmatpush1.bf16.msra.mxu0 %v629
        %633 = vmatprep.subr.bf16.mxu0 0
        %634 = vmatpush1.bf16.msra.mxu0 0
        %635 = vmatprep.subr.bf16.mxu0 0
        %636 = vmatpush1.bf16.msra.mxu0 0
        %637 = vmatprep.subr.bf16.mxu0 0
        %638 = vmatpush1.bf16.msra.mxu0 0
        %639 = vmatprep.subr.bf16.mxu0 0
        %640 = vmatpush1.bf16.msra.mxu0 0
        %641 = vmatprep.subr.bf16.mxu0 0
        %642 = vmatpush1.bf16.msra.mxu0 0
        %643 = vmatprep.subr.bf16.mxu0 0
        %644 = vmatpush1.bf16.msra.mxu0 0
        %645 = vmatprep.subr.bf16.mxu0 0
        %646 = vmatpush1.bf16.msra.mxu0 0
        %647 = vmatprep.subr.bf16.mxu0 0
        %648 = vmatpush1.bf16.msra.mxu0 0
        %649 = vmatprep.subr.bf16.mxu0 0
        %650 = vmatpush1.bf16.msra.mxu0 0
        %651 = vmatprep.subr.bf16.mxu0 0
        %652 = vmatpush1.bf16.msra.mxu0 0
        %653 = vmatprep.subr.bf16.mxu0 0
        %654 = vmatpush1.bf16.msra.mxu0 0
        %655 = vmatprep.subr.bf16.mxu0 0
        %656 = vmatpush1.bf16.msra.mxu0 0
        %657 = vmatprep.subr.bf16.mxu0 0
        %658 = vmatpush1.bf16.msra.mxu0 0
        %659 = vmatprep.subr.bf16.mxu0 0
        %660 = vmatpush1.bf16.msra.mxu0 0
        %661 = vmatprep.subr.bf16.mxu0 0
        %662 = vmatpush1.bf16.msra.mxu0 0
        %663 = vmatprep.mubr.bf16.mxu0 0
        %664 = vmatmul.mubr.bf16.gmra.mrb[0].mxu0 %v626
        %v665 = vpop.f32.mrb[0].mxu0
        %v666 = vadd.f32 0.0, %v665
        %v667 = vpop.f32.mrb[0].mxu0
        %v668 = vpop.f32.mrb[0].mxu0
        %v669 = vpop.f32.mrb[0].mxu0
        %670 = vdwg.mxu0
        %v671 = vadd.f32 %v611, %v666
        %v672 = vld [vmem:[%s382] sm:$0x3]
        %s673 = scalar_lea.vmem %s1, 20
        %v674 = vld [vmem:[%s673] sm:$0xf]
        %v677 = vunpack.c.l.s4 1983009808
        %v678 = vunpack.c.0.s8 %v677
        %v679 = vlaneseq
        %v680 = vshrl.u32 %v679, 7
        %v681 = vsub.s32 %v678, %v680
        %v682 = vrot.slane %v672, %v681
        %683 = vrot.lane.b32.xlu0 %v682, 117
        %v684 = vpop.permute.xlu0 %683
        %v686 = vsel %vm398, %v674, 0
        %v689 = vsel %vm402, %v684, 0
        %691 = vmatprep.subr.bf16.mxu0 0
        %692 = vmatpush1.bf16.msra.mxu0 %v689
        %693 = vmatprep.subr.bf16.mxu0 0
        %694 = vmatpush1.bf16.msra.mxu0 0
        %695 = vmatprep.subr.bf16.mxu0 0
        %696 = vmatpush1.bf16.msra.mxu0 0
        %697 = vmatprep.subr.bf16.mxu0 0
        %698 = vmatpush1.bf16.msra.mxu0 0
        %699 = vmatprep.subr.bf16.mxu0 0
        %700 = vmatpush1.bf16.msra.mxu0 0
        %701 = vmatprep.subr.bf16.mxu0 0
        %702 = vmatpush1.bf16.msra.mxu0 0
        %703 = vmatprep.subr.bf16.mxu0 0
        %704 = vmatpush1.bf16.msra.mxu0 0
        %705 = vmatprep.subr.bf16.mxu0 0
        %706 = vmatpush1.bf16.msra.mxu0 0
        %707 = vmatprep.subr.bf16.mxu0 0
        %708 = vmatpush1.bf16.msra.mxu0 0
        %709 = vmatprep.subr.bf16.mxu0 0
        %710 = vmatpush1.bf16.msra.mxu0 0
        %711 = vmatprep.subr.bf16.mxu0 0
        %712 = vmatpush1.bf16.msra.mxu0 0
        %713 = vmatprep.subr.bf16.mxu0 0
        %714 = vmatpush1.bf16.msra.mxu0 0
        %715 = vmatprep.subr.bf16.mxu0 0
        %716 = vmatpush1.bf16.msra.mxu0 0
        %717 = vmatprep.subr.bf16.mxu0 0
        %718 = vmatpush1.bf16.msra.mxu0 0
        %719 = vmatprep.subr.bf16.mxu0 0
        %720 = vmatpush1.bf16.msra.mxu0 0
        %721 = vmatprep.subr.bf16.mxu0 0
        %722 = vmatpush1.bf16.msra.mxu0 0
        %723 = vmatprep.mubr.bf16.mxu0 0
        %724 = vmatmul.mubr.bf16.gmra.mrb[0].mxu0 %v686
        %v725 = vpop.f32.mrb[0].mxu0
        %v726 = vadd.f32 0.0, %v725
        %v727 = vpop.f32.mrb[0].mxu0
        %v728 = vpop.f32.mrb[0].mxu0
        %v729 = vpop.f32.mrb[0].mxu0
        %730 = vdwg.mxu0
        %v731 = vadd.f32 %v671, %v726
        %v732 = vld [vmem:[%s382] sm:$0x3]
        %s733 = scalar_lea.vmem %s1, 24
        %v734 = vld [vmem:[%s733] sm:$0xf]
        %v737 = vunpack.c.l.s4 1983009808
        %v738 = vunpack.c.0.s8 %v737
        %v739 = vlaneseq
        %v740 = vshrl.u32 %v739, 7
        %v741 = vsub.s32 %v738, %v740
        %v742 = vrot.slane %v732, %v741
        %743 = vrot.lane.b32.xlu0 %v742, 110
        %v744 = vpop.permute.xlu0 %743
        %v746 = vsel %vm398, %v734, 0
        %v749 = vsel %vm402, %v744, 0
        %751 = vmatprep.subr.bf16.mxu0 0
        %752 = vmatpush1.bf16.msra.mxu0 %v749
        %753 = vmatprep.subr.bf16.mxu0 0
        %754 = vmatpush1.bf16.msra.mxu0 0
        %755 = vmatprep.subr.bf16.mxu0 0
        %756 = vmatpush1.bf16.msra.mxu0 0
        %757 = vmatprep.subr.bf16.mxu0 0
        %758 = vmatpush1.bf16.msra.mxu0 0
        %759 = vmatprep.subr.bf16.mxu0 0
        %760 = vmatpush1.bf16.msra.mxu0 0
        %761 = vmatprep.subr.bf16.mxu0 0
        %762 = vmatpush1.bf16.msra.mxu0 0
        %763 = vmatprep.subr.bf16.mxu0 0
        %764 = vmatpush1.bf16.msra.mxu0 0
        %765 = vmatprep.subr.bf16.mxu0 0
        %766 = vmatpush1.bf16.msra.mxu0 0
        %767 = vmatprep.subr.bf16.mxu0 0
        %768 = vmatpush1.bf16.msra.mxu0 0
        %769 = vmatprep.subr.bf16.mxu0 0
        %770 = vmatpush1.bf16.msra.mxu0 0
        %771 = vmatprep.subr.bf16.mxu0 0
        %772 = vmatpush1.bf16.msra.mxu0 0
        %773 = vmatprep.subr.bf16.mxu0 0
        %774 = vmatpush1.bf16.msra.mxu0 0
        %775 = vmatprep.subr.bf16.mxu0 0
        %776 = vmatpush1.bf16.msra.mxu0 0
        %777 = vmatprep.subr.bf16.mxu0 0
        %778 = vmatpush1.bf16.msra.mxu0 0
        %779 = vmatprep.subr.bf16.mxu0 0
        %780 = vmatpush1.bf16.msra.mxu0 0
        %781 = vmatprep.subr.bf16.mxu0 0
        %782 = vmatpush1.bf16.msra.mxu0 0
        %783 = vmatprep.mubr.bf16.mxu0 0
        %784 = vmatmul.mubr.bf16.gmra.mrb[0].mxu0 %v746
        %v785 = vpop.f32.mrb[0].mxu0
        %v786 = vadd.f32 0.0, %v785
        %v787 = vpop.f32.mrb[0].mxu0
        %v788 = vpop.f32.mrb[0].mxu0
        %v789 = vpop.f32.mrb[0].mxu0
        %790 = vdwg.mxu0
        %v791 = vadd.f32 %v731, %v786
        %v792 = vld [vmem:[%s382] sm:$0x3]
        %s793 = scalar_lea.vmem %s1, 28
        %v794 = vld [vmem:[%s793] sm:$0xf]
        %v797 = vunpack.c.l.s4 1983009808
        %v798 = vunpack.c.0.s8 %v797
        %v799 = vlaneseq
        %v800 = vshrl.u32 %v799, 7
        %v801 = vsub.s32 %v798, %v800
        %v802 = vrot.slane %v792, %v801
        %803 = vrot.lane.b32.xlu0 %v802, 109
        %v804 = vpop.permute.xlu0 %803
        %v806 = vsel %vm398, %v794, 0
        %v809 = vsel %vm402, %v804, 0
        %811 = vmatprep.subr.bf16.mxu0 0
        %812 = vmatpush1.bf16.msra.mxu0 %v809
        %813 = vmatprep.subr.bf16.mxu0 0
        %814 = vmatpush1.bf16.msra.mxu0 0
        %815 = vmatprep.subr.bf16.mxu0 0
        %816 = vmatpush1.bf16.msra.mxu0 0
        %817 = vmatprep.subr.bf16.mxu0 0
        %818 = vmatpush1.bf16.msra.mxu0 0
        %819 = vmatprep.subr.bf16.mxu0 0
        %820 = vmatpush1.bf16.msra.mxu0 0
        %821 = vmatprep.subr.bf16.mxu0 0
        %822 = vmatpush1.bf16.msra.mxu0 0
        %823 = vmatprep.subr.bf16.mxu0 0
        %824 = vmatpush1.bf16.msra.mxu0 0
        %825 = vmatprep.subr.bf16.mxu0 0
        %826 = vmatpush1.bf16.msra.mxu0 0
        %827 = vmatprep.subr.bf16.mxu0 0
        %828 = vmatpush1.bf16.msra.mxu0 0
        %829 = vmatprep.subr.bf16.mxu0 0
        %830 = vmatpush1.bf16.msra.mxu0 0
        %831 = vmatprep.subr.bf16.mxu0 0
        %832 = vmatpush1.bf16.msra.mxu0 0
        %833 = vmatprep.subr.bf16.mxu0 0
        %834 = vmatpush1.bf16.msra.mxu0 0
        %835 = vmatprep.subr.bf16.mxu0 0
        %836 = vmatpush1.bf16.msra.mxu0 0
        %837 = vmatprep.subr.bf16.mxu0 0
        %838 = vmatpush1.bf16.msra.mxu0 0
        %839 = vmatprep.subr.bf16.mxu0 0
        %840 = vmatpush1.bf16.msra.mxu0 0
        %841 = vmatprep.subr.bf16.mxu0 0
        %842 = vmatpush1.bf16.msra.mxu0 0
        %843 = vmatprep.mubr.bf16.mxu0 0
        %844 = vmatmul.mubr.bf16.gmra.mrb[0].mxu0 %v806
        %v845 = vpop.f32.mrb[0].mxu0
        %v846 = vadd.f32 0.0, %v845
        %v847 = vpop.f32.mrb[0].mxu0
        %v848 = vpop.f32.mrb[0].mxu0
        %v849 = vpop.f32.mrb[0].mxu0
        %850 = vdwg.mxu0
        %v851 = vadd.f32 %v791, %v846
        %v852 = vld [vmem:[%s382] sm:$0x3]
        %s853 = scalar_lea.vmem %s1, 32
        %v854 = vld [vmem:[%s853] sm:$0xf]
        %v857 = vunpack.c.l.s4 1983009808
        %v858 = vunpack.c.0.s8 %v857
        %v859 = vlaneseq
        %v860 = vshrl.u32 %v859, 7
        %v861 = vsub.s32 %v858, %v860
        %v862 = vrot.slane %v852, %v861
        %863 = vrot.lane.b32.xlu0 %v862, 108
        %v864 = vpop.permute.xlu0 %863
        %v866 = vsel %vm398, %v854, 0
        %v869 = vsel %vm402, %v864, 0
        %871 = vmatprep.subr.bf16.mxu0 0
        %872 = vmatpush1.bf16.msra.mxu0 %v869
        %873 = vmatprep.subr.bf16.mxu0 0
        %874 = vmatpush1.bf16.msra.mxu0 0
        %875 = vmatprep.subr.bf16.mxu0 0
        %876 = vmatpush1.bf16.msra.mxu0 0
        %877 = vmatprep.subr.bf16.mxu0 0
        %878 = vmatpush1.bf16.msra.mxu0 0
        %879 = vmatprep.subr.bf16.mxu0 0
        %880 = vmatpush1.bf16.msra.mxu0 0
        %881 = vmatprep.subr.bf16.mxu0 0
        %882 = vmatpush1.bf16.msra.mxu0 0
        %883 = vmatprep.subr.bf16.mxu0 0
        %884 = vmatpush1.bf16.msra.mxu0 0
        %885 = vmatprep.subr.bf16.mxu0 0
        %886 = vmatpush1.bf16.msra.mxu0 0
        %887 = vmatprep.subr.bf16.mxu0 0
        %888 = vmatpush1.bf16.msra.mxu0 0
        %889 = vmatprep.subr.bf16.mxu0 0
        %890 = vmatpush1.bf16.msra.mxu0 0
        %891 = vmatprep.subr.bf16.mxu0 0
        %892 = vmatpush1.bf16.msra.mxu0 0
        %893 = vmatprep.subr.bf16.mxu0 0
        %894 = vmatpush1.bf16.msra.mxu0 0
        %895 = vmatprep.subr.bf16.mxu0 0
        %896 = vmatpush1.bf16.msra.mxu0 0
        %897 = vmatprep.subr.bf16.mxu0 0
        %898 = vmatpush1.bf16.msra.mxu0 0
        %899 = vmatprep.subr.bf16.mxu0 0
        %900 = vmatpush1.bf16.msra.mxu0 0
        %901 = vmatprep.subr.bf16.mxu0 0
        %902 = vmatpush1.bf16.msra.mxu0 0
        %903 = vmatprep.mubr.bf16.mxu0 0
        %904 = vmatmul.mubr.bf16.gmra.mrb[0].mxu0 %v866
        %v905 = vpop.f32.mrb[0].mxu0
        %v906 = vadd.f32 0.0, %v905
        %v907 = vpop.f32.mrb[0].mxu0
        %v908 = vpop.f32.mrb[0].mxu0
        %v909 = vpop.f32.mrb[0].mxu0
        %910 = vdwg.mxu0
        %v911 = vadd.f32 %v851, %v906
        %v912 = vld [vmem:[%s2] sm:$0xff]
        %914 = vset.pattern.permute.xlu0 0
        %915 = vperm.xlu0 %914, %v912
        %v916 = vpop.permute.xlu0 %915
        %v918 = vadd.f32 %v911, %v916
        %v919 = vmax.f32 %v918, 0.0
        %v920 = vld [vmem:[%s3] sm:$0xff]
        %922 = vset.pattern.permute.xlu0 0
        %923 = vperm.xlu0 %922, %v920
        %v924 = vpop.permute.xlu0 %923
        %v926 = vmul.f32 %v919, %v924
        %v927 = vld [vmem:[%s4] sm:$0xff]
        %929 = vset.pattern.permute.xlu0 0
        %930 = vperm.xlu0 %929, %v927
        %v931 = vpop.permute.xlu0 %930
        %v933 = vadd.f32 %v926, %v931
        %v934 = vlaneseq
        %v935 = vand.u32 %v934, 127
        %vm936 = vcmp.lt.s32.totalorder %v935, 0
        %v937 = vsub.s32 0, %v935
        %v938 = vsel %vm936, %v937, %v935
        %v939 = vmul.u32.u64.compose %v938, 3817748708
        %v940 = vextract.low.u32 %v939
        %v941 = vextract.high.u32 %v939
        %v942 = vshrl.u32 %v941, 3
        %v943 = vmul.u32 %v942, 9
        %v944 = vsub.s32 %v938, %v943
        %v945 = vsub.s32 0, %v944
        %v946 = vsel %vm936, %v945, %v944
        %vm947 = vcmp.ne.s32.totalorder %v946, 0
        %vm948 = vcmp.lt.s32.totalorder %v946, 0
        %vm949 = vmand %vm948, %vm947
        %v950 = vadd.s32 %v946, 9
        %v951 = vsel %vm949, %v950, %v946
        %vm952 = vcmp.eq.s32.totalorder %v951, 8
        %v953 = vsel %vm952, 1, 0
        %vm954 = vcmp.eq.s32.totalorder %v953, 1
        %v955 = vsel %vm954, 0.0, %v933
        %vm956 = vcmask 3072
        %957 = vst.msk [vmem:[#allocation2] sm:$0xf] %vm956, 0
        %vm958 = vcmask 454072
        %959 = vst.msk [vmem:[#allocation2] sm:$0xf] %vm958, 0
        %v960 = vpack.c.bf16 %v955, %v955
        %v962 = vunpack.c.l.b16 %v960
        %v963 = vpack.c.b16 %v962, %v962
        %964 = vrot.lane.b32.xlu0 %v963, 1
        %v965 = vpop.permute.xlu0 %964
        %vm967 = vcmask 445448
        %968 = vst.msk [vmem:[#allocation2] sm:$0xf] %vm967, %v965
        %p969 = scmp.eq.s32.totalorder %s29, 0
        // Predicated region
        $region61: #{tpu_custom_call.1} parent=59 // pred_check
          %p970 = pneg %p969
        $region62: #{tpu_custom_call.1} parent=59 // pred_check_branch
          %972 = sbr.rel (%p970) target = $region64
        $region63: #{tpu_custom_call.1} parent=59 // pred_region
          %vm973 = vcmask 76808
          %974 = vst.msk [vmem:[#allocation2] sm:$0xf] %vm973, 0
        $region64: #{tpu_custom_call.1} parent=59 // pred_fallthru
          _
        %p975 = scmp.eq.s32.totalorder %s29, 1
        // Predicated region
        $region65: #{tpu_custom_call.1} parent=59 // pred_check
          %p976 = pneg %p975
        $region66: #{tpu_custom_call.1} parent=59 // pred_check_branch
          %978 = sbr.rel (%p976) target = $region68
        $region67: #{tpu_custom_call.1} parent=59 // pred_region
          %vm979 = vcmask 445808
          %980 = vst.msk [vmem:[#allocation2] sm:$0xf] %vm979, 0
        $region68: #{tpu_custom_call.1} parent=59 // pred_fallthru
          _
        %v981 = vld [vmem:[#allocation2] sm:$0xf]
        %v982 = vld [vmem:[%s5] sm:$0xf]
        %s983 = scalar_lea.vmem %s5, 4
        %v984 = vld [vmem:[%s983] sm:$0xf]
        %v986 = vunpack.c.l.b16 %v981
        %v987 = vpack.c.b16 %v986, %v986
        %988 = vrot.lane.b32.xlu0 %v987, 127
        %v989 = vpop.permute.xlu0 %988
        %vm990 = vcmask 64512
        %v992 = vsel %vm990, %v984, 0
        %vm994 = vcmask 1043456
        %v996 = vsel %vm994, %v989, 0
        %998 = vmatprep.subr.bf16.mxu0 0
        %999 = vmatpush1.bf16.msra.mxu0 %v996
        %1000 = vmatprep.subr.bf16.mxu0 0
        %1001 = vmatpush1.bf16.msra.mxu0 0
        %1002 = vmatprep.subr.bf16.mxu0 0
        %1003 = vmatpush1.bf16.msra.mxu0 0
        %1004 = vmatprep.subr.bf16.mxu0 0
        %1005 = vmatpush1.bf16.msra.mxu0 0
        %1006 = vmatprep.subr.bf16.mxu0 0
        %1007 = vmatpush1.bf16.msra.mxu0 0
        %1008 = vmatprep.subr.bf16.mxu0 0
        %1009 = vmatpush1.bf16.msra.mxu0 0
        %1010 = vmatprep.subr.bf16.mxu0 0
        %1011 = vmatpush1.bf16.msra.mxu0 0
        %1012 = vmatprep.subr.bf16.mxu0 0
        %1013 = vmatpush1.bf16.msra.mxu0 0
        %1014 = vmatprep.subr.bf16.mxu0 0
        %1015 = vmatpush1.bf16.msra.mxu0 0
        %1016 = vmatprep.subr.bf16.mxu0 0
        %1017 = vmatpush1.bf16.msra.mxu0 0
        %1018 = vmatprep.subr.bf16.mxu0 0
        %1019 = vmatpush1.bf16.msra.mxu0 0
        %1020 = vmatprep.subr.bf16.mxu0 0
        %1021 = vmatpush1.bf16.msra.mxu0 0
        %1022 = vmatprep.subr.bf16.mxu0 0
        %1023 = vmatpush1.bf16.msra.mxu0 0
        %1024 = vmatprep.subr.bf16.mxu0 0
        %1025 = vmatpush1.bf16.msra.mxu0 0
        %1026 = vmatprep.subr.bf16.mxu0 0
        %1027 = vmatpush1.bf16.msra.mxu0 0
        %1028 = vmatprep.subr.bf16.mxu0 0
        %1029 = vmatpush1.bf16.msra.mxu0 0
        %1030 = vmatprep.mubr.bf16.mxu0 0
        %1031 = vmatmul.mubr.bf16.gmra.mrb[0].mxu0 %v992
        %v1032 = vpop.f32.mrb[0].mxu0
        %v1033 = vadd.f32 0.0, %v1032
        %v1034 = vpop.f32.mrb[0].mxu0
        %v1035 = vpop.f32.mrb[0].mxu0
        %v1036 = vpop.f32.mrb[0].mxu0
        %1037 = vdwg.mxu0
        %v1039 = vsel %vm990, %v982, 0
        %v1042 = vsel %vm994, %v981, 0
        %1044 = vmatprep.subr.bf16.mxu0 0
        %1045 = vmatpush1.bf16.msra.mxu0 %v1042
        %1046 = vmatprep.subr.bf16.mxu0 0
        %1047 = vmatpush1.bf16.msra.mxu0 0
        %1048 = vmatprep.subr.bf16.mxu0 0
        %1049 = vmatpush1.bf16.msra.mxu0 0
        %1050 = vmatprep.subr.bf16.mxu0 0
        %1051 = vmatpush1.bf16.msra.mxu0 0
        %1052 = vmatprep.subr.bf16.mxu0 0
        %1053 = vmatpush1.bf16.msra.mxu0 0
        %1054 = vmatprep.subr.bf16.mxu0 0
        %1055 = vmatpush1.bf16.msra.mxu0 0
        %1056 = vmatprep.subr.bf16.mxu0 0
        %1057 = vmatpush1.bf16.msra.mxu0 0
        %1058 = vmatprep.subr.bf16.mxu0 0
        %1059 = vmatpush1.bf16.msra.mxu0 0
        %1060 = vmatprep.subr.bf16.mxu0 0
        %1061 = vmatpush1.bf16.msra.mxu0 0
        %1062 = vmatprep.subr.bf16.mxu0 0
        %1063 = vmatpush1.bf16.msra.mxu0 0
        %1064 = vmatprep.subr.bf16.mxu0 0
        %1065 = vmatpush1.bf16.msra.mxu0 0
        %1066 = vmatprep.subr.bf16.mxu0 0
        %1067 = vmatpush1.bf16.msra.mxu0 0
        %1068 = vmatprep.subr.bf16.mxu0 0
        %1069 = vmatpush1.bf16.msra.mxu0 0
        %1070 = vmatprep.subr.bf16.mxu0 0
        %1071 = vmatpush1.bf16.msra.mxu0 0
        %1072 = vmatprep.subr.bf16.mxu0 0
        %1073 = vmatpush1.bf16.msra.mxu0 0
        %1074 = vmatprep.subr.bf16.mxu0 0
        %1075 = vmatpush1.bf16.msra.mxu0 0
        %1076 = vmatprep.mubr.bf16.mxu0 0
        %1077 = vmatmul.mubr.bf16.gmra.mrb[0].mxu0 %v1039
        %v1078 = vpop.f32.mrb[0].mxu0
        %v1079 = vadd.f32 %v1033, %v1078
        %v1080 = vpop.f32.mrb[0].mxu0
        %v1081 = vpop.f32.mrb[0].mxu0
        %v1082 = vpop.f32.mrb[0].mxu0
        %1083 = vdwg.mxu0
        %s1084 = scalar_lea.vmem %s5, 8
        %v1085 = vld [vmem:[%s1084] sm:$0xf]
        %1086 = vrot.lane.b32.xlu0 %v987, 126
        %v1087 = vpop.permute.xlu0 %1086
        %v1089 = vsel %vm990, %v1085, 0
        %v1092 = vsel %vm994, %v1087, 0
        %1094 = vmatprep.subr.bf16.mxu0 0
        %1095 = vmatpush1.bf16.msra.mxu0 %v1092
        %1096 = vmatprep.subr.bf16.mxu0 0
        %1097 = vmatpush1.bf16.msra.mxu0 0
        %1098 = vmatprep.subr.bf16.mxu0 0
        %1099 = vmatpush1.bf16.msra.mxu0 0
        %1100 = vmatprep.subr.bf16.mxu0 0
        %1101 = vmatpush1.bf16.msra.mxu0 0
        %1102 = vmatprep.subr.bf16.mxu0 0
        %1103 = vmatpush1.bf16.msra.mxu0 0
        %1104 = vmatprep.subr.bf16.mxu0 0
        %1105 = vmatpush1.bf16.msra.mxu0 0
        %1106 = vmatprep.subr.bf16.mxu0 0
        %1107 = vmatpush1.bf16.msra.mxu0 0
        %1108 = vmatprep.subr.bf16.mxu0 0
        %1109 = vmatpush1.bf16.msra.mxu0 0
        %1110 = vmatprep.subr.bf16.mxu0 0
        %1111 = vmatpush1.bf16.msra.mxu0 0
        %1112 = vmatprep.subr.bf16.mxu0 0
        %1113 = vmatpush1.bf16.msra.mxu0 0
        %1114 = vmatprep.subr.bf16.mxu0 0
        %1115 = vmatpush1.bf16.msra.mxu0 0
        %1116 = vmatprep.subr.bf16.mxu0 0
        %1117 = vmatpush1.bf16.msra.mxu0 0
        %1118 = vmatprep.subr.bf16.mxu0 0
        %1119 = vmatpush1.bf16.msra.mxu0 0
        %1120 = vmatprep.subr.bf16.mxu0 0
        %1121 = vmatpush1.bf16.msra.mxu0 0
        %1122 = vmatprep.subr.bf16.mxu0 0
        %1123 = vmatpush1.bf16.msra.mxu0 0
        %1124 = vmatprep.subr.bf16.mxu0 0
        %1125 = vmatpush1.bf16.msra.mxu0 0
        %1126 = vmatprep.mubr.bf16.mxu0 0
        %1127 = vmatmul.mubr.bf16.gmra.mrb[0].mxu0 %v1089
        %v1128 = vpop.f32.mrb[0].mxu0
        %v1129 = vadd.f32 0.0, %v1128
        %v1130 = vpop.f32.mrb[0].mxu0
        %v1131 = vpop.f32.mrb[0].mxu0
        %v1132 = vpop.f32.mrb[0].mxu0
        %1133 = vdwg.mxu0
        %v1134 = vadd.f32 %v1079, %v1129
        %s1135 = scalar_lea.vmem %s5, 12
        %v1136 = vld [vmem:[%s1135] sm:$0xf]
        %1137 = vrot.lane.b32.xlu0 %v987, 119
        %v1138 = vpop.permute.xlu0 %1137
        %v1140 = vsel %vm990, %v1136, 0
        %v1143 = vsel %vm994, %v1138, 0
        %1145 = vmatprep.subr.bf16.mxu0 0
        %1146 = vmatpush1.bf16.msra.mxu0 %v1143
        %1147 = vmatprep.subr.bf16.mxu0 0
        %1148 = vmatpush1.bf16.msra.mxu0 0
        %1149 = vmatprep.subr.bf16.mxu0 0
        %1150 = vmatpush1.bf16.msra.mxu0 0
        %1151 = vmatprep.subr.bf16.mxu0 0
        %1152 = vmatpush1.bf16.msra.mxu0 0
        %1153 = vmatprep.subr.bf16.mxu0 0
        %1154 = vmatpush1.bf16.msra.mxu0 0
        %1155 = vmatprep.subr.bf16.mxu0 0
        %1156 = vmatpush1.bf16.msra.mxu0 0
        %1157 = vmatprep.subr.bf16.mxu0 0
        %1158 = vmatpush1.bf16.msra.mxu0 0
        %1159 = vmatprep.subr.bf16.mxu0 0
        %1160 = vmatpush1.bf16.msra.mxu0 0
        %1161 = vmatprep.subr.bf16.mxu0 0
        %1162 = vmatpush1.bf16.msra.mxu0 0
        %1163 = vmatprep.subr.bf16.mxu0 0
        %1164 = vmatpush1.bf16.msra.mxu0 0
        %1165 = vmatprep.subr.bf16.mxu0 0
        %1166 = vmatpush1.bf16.msra.mxu0 0
        %1167 = vmatprep.subr.bf16.mxu0 0
        %1168 = vmatpush1.bf16.msra.mxu0 0
        %1169 = vmatprep.subr.bf16.mxu0 0
        %1170 = vmatpush1.bf16.msra.mxu0 0
        %1171 = vmatprep.subr.bf16.mxu0 0
        %1172 = vmatpush1.bf16.msra.mxu0 0
        %1173 = vmatprep.subr.bf16.mxu0 0
        %1174 = vmatpush1.bf16.msra.mxu0 0
        %1175 = vmatprep.subr.bf16.mxu0 0
        %1176 = vmatpush1.bf16.msra.mxu0 0
        %1177 = vmatprep.mubr.bf16.mxu0 0
        %1178 = vmatmul.mubr.bf16.gmra.mrb[0].mxu0 %v1140
        %v1179 = vpop.f32.mrb[0].mxu0
        %v1180 = vadd.f32 0.0, %v1179
        %v1181 = vpop.f32.mrb[0].mxu0
        %v1182 = vpop.f32.mrb[0].mxu0
        %v1183 = vpop.f32.mrb[0].mxu0
        %1184 = vdwg.mxu0
        %v1185 = vadd.f32 %v1134, %v1180
        %s1186 = scalar_lea.vmem %s5, 16
        %v1187 = vld [vmem:[%s1186] sm:$0xf]
        %1188 = vrot.lane.b32.xlu0 %v987, 118
        %v1189 = vpop.permute.xlu0 %1188
        %v1191 = vsel %vm990, %v1187, 0
        %v1194 = vsel %vm994, %v1189, 0
        %1196 = vmatprep.subr.bf16.mxu0 0
        %1197 = vmatpush1.bf16.msra.mxu0 %v1194
        %1198 = vmatprep.subr.bf16.mxu0 0
        %1199 = vmatpush1.bf16.msra.mxu0 0
        %1200 = vmatprep.subr.bf16.mxu0 0
        %1201 = vmatpush1.bf16.msra.mxu0 0
        %1202 = vmatprep.subr.bf16.mxu0 0
        %1203 = vmatpush1.bf16.msra.mxu0 0
        %1204 = vmatprep.subr.bf16.mxu0 0
        %1205 = vmatpush1.bf16.msra.mxu0 0
        %1206 = vmatprep.subr.bf16.mxu0 0
        %1207 = vmatpush1.bf16.msra.mxu0 0
        %1208 = vmatprep.subr.bf16.mxu0 0
        %1209 = vmatpush1.bf16.msra.mxu0 0
        %1210 = vmatprep.subr.bf16.mxu0 0
        %1211 = vmatpush1.bf16.msra.mxu0 0
        %1212 = vmatprep.subr.bf16.mxu0 0
        %1213 = vmatpush1.bf16.msra.mxu0 0
        %1214 = vmatprep.subr.bf16.mxu0 0
        %1215 = vmatpush1.bf16.msra.mxu0 0
        %1216 = vmatprep.subr.bf16.mxu0 0
        %1217 = vmatpush1.bf16.msra.mxu0 0
        %1218 = vmatprep.subr.bf16.mxu0 0
        %1219 = vmatpush1.bf16.msra.mxu0 0
        %1220 = vmatprep.subr.bf16.mxu0 0
        %1221 = vmatpush1.bf16.msra.mxu0 0
        %1222 = vmatprep.subr.bf16.mxu0 0
        %1223 = vmatpush1.bf16.msra.mxu0 0
        %1224 = vmatprep.subr.bf16.mxu0 0
        %1225 = vmatpush1.bf16.msra.mxu0 0
        %1226 = vmatprep.subr.bf16.mxu0 0
        %1227 = vmatpush1.bf16.msra.mxu0 0
        %1228 = vmatprep.mubr.bf16.mxu0 0
        %1229 = vmatmul.mubr.bf16.gmra.mrb[0].mxu0 %v1191
        %v1230 = vpop.f32.mrb[0].mxu0
        %v1231 = vadd.f32 0.0, %v1230
        %v1232 = vpop.f32.mrb[0].mxu0
        %v1233 = vpop.f32.mrb[0].mxu0
        %v1234 = vpop.f32.mrb[0].mxu0
        %1235 = vdwg.mxu0
        %v1236 = vadd.f32 %v1185, %v1231
        %s1237 = scalar_lea.vmem %s5, 20
        %v1238 = vld [vmem:[%s1237] sm:$0xf]
        %1239 = vrot.lane.b32.xlu0 %v987, 117
        %v1240 = vpop.permute.xlu0 %1239
        %v1242 = vsel %vm990, %v1238, 0
        %v1245 = vsel %vm994, %v1240, 0
        %1247 = vmatprep.subr.bf16.mxu0 0
        %1248 = vmatpush1.bf16.msra.mxu0 %v1245
        %1249 = vmatprep.subr.bf16.mxu0 0
        %1250 = vmatpush1.bf16.msra.mxu0 0
        %1251 = vmatprep.subr.bf16.mxu0 0
        %1252 = vmatpush1.bf16.msra.mxu0 0
        %1253 = vmatprep.subr.bf16.mxu0 0
        %1254 = vmatpush1.bf16.msra.mxu0 0
        %1255 = vmatprep.subr.bf16.mxu0 0
        %1256 = vmatpush1.bf16.msra.mxu0 0
        %1257 = vmatprep.subr.bf16.mxu0 0
        %1258 = vmatpush1.bf16.msra.mxu0 0
        %1259 = vmatprep.subr.bf16.mxu0 0
        %1260 = vmatpush1.bf16.msra.mxu0 0
        %1261 = vmatprep.subr.bf16.mxu0 0
        %1262 = vmatpush1.bf16.msra.mxu0 0
        %1263 = vmatprep.subr.bf16.mxu0 0
        %1264 = vmatpush1.bf16.msra.mxu0 0
        %1265 = vmatprep.subr.bf16.mxu0 0
        %1266 = vmatpush1.bf16.msra.mxu0 0
        %1267 = vmatprep.subr.bf16.mxu0 0
        %1268 = vmatpush1.bf16.msra.mxu0 0
        %1269 = vmatprep.subr.bf16.mxu0 0
        %1270 = vmatpush1.bf16.msra.mxu0 0
        %1271 = vmatprep.subr.bf16.mxu0 0
        %1272 = vmatpush1.bf16.msra.mxu0 0
        %1273 = vmatprep.subr.bf16.mxu0 0
        %1274 = vmatpush1.bf16.msra.mxu0 0
        %1275 = vmatprep.subr.bf16.mxu0 0
        %1276 = vmatpush1.bf16.msra.mxu0 0
        %1277 = vmatprep.subr.bf16.mxu0 0
        %1278 = vmatpush1.bf16.msra.mxu0 0
        %1279 = vmatprep.mubr.bf16.mxu0 0
        %1280 = vmatmul.mubr.bf16.gmra.mrb[0].mxu0 %v1242
        %v1281 = vpop.f32.mrb[0].mxu0
        %v1282 = vadd.f32 0.0, %v1281
        %v1283 = vpop.f32.mrb[0].mxu0
        %v1284 = vpop.f32.mrb[0].mxu0
        %v1285 = vpop.f32.mrb[0].mxu0
        %1286 = vdwg.mxu0
        %v1287 = vadd.f32 %v1236, %v1282
        %s1288 = scalar_lea.vmem %s5, 24
        %v1289 = vld [vmem:[%s1288] sm:$0xf]
        %1290 = vrot.lane.b32.xlu0 %v987, 110
        %v1291 = vpop.permute.xlu0 %1290
        %v1293 = vsel %vm990, %v1289, 0
        %v1296 = vsel %vm994, %v1291, 0
        %1298 = vmatprep.subr.bf16.mxu0 0
        %1299 = vmatpush1.bf16.msra.mxu0 %v1296
        %1300 = vmatprep.subr.bf16.mxu0 0
        %1301 = vmatpush1.bf16.msra.mxu0 0
        %1302 = vmatprep.subr.bf16.mxu0 0
        %1303 = vmatpush1.bf16.msra.mxu0 0
        %1304 = vmatprep.subr.bf16.mxu0 0
        %1305 = vmatpush1.bf16.msra.mxu0 0
        %1306 = vmatprep.subr.bf16.mxu0 0
        %1307 = vmatpush1.bf16.msra.mxu0 0
        %1308 = vmatprep.subr.bf16.mxu0 0
        %1309 = vmatpush1.bf16.msra.mxu0 0
        %1310 = vmatprep.subr.bf16.mxu0 0
        %1311 = vmatpush1.bf16.msra.mxu0 0
        %1312 = vmatprep.subr.bf16.mxu0 0
        %1313 = vmatpush1.bf16.msra.mxu0 0
        %1314 = vmatprep.subr.bf16.mxu0 0
        %1315 = vmatpush1.bf16.msra.mxu0 0
        %1316 = vmatprep.subr.bf16.mxu0 0
        %1317 = vmatpush1.bf16.msra.mxu0 0
        %1318 = vmatprep.subr.bf16.mxu0 0
        %1319 = vmatpush1.bf16.msra.mxu0 0
        %1320 = vmatprep.subr.bf16.mxu0 0
        %1321 = vmatpush1.bf16.msra.mxu0 0
        %1322 = vmatprep.subr.bf16.mxu0 0
        %1323 = vmatpush1.bf16.msra.mxu0 0
        %1324 = vmatprep.subr.bf16.mxu0 0
        %1325 = vmatpush1.bf16.msra.mxu0 0
        %1326 = vmatprep.subr.bf16.mxu0 0
        %1327 = vmatpush1.bf16.msra.mxu0 0
        %1328 = vmatprep.subr.bf16.mxu0 0
        %1329 = vmatpush1.bf16.msra.mxu0 0
        %1330 = vmatprep.mubr.bf16.mxu0 0
        %1331 = vmatmul.mubr.bf16.gmra.mrb[0].mxu0 %v1293
        %v1332 = vpop.f32.mrb[0].mxu0
        %v1333 = vadd.f32 0.0, %v1332
        %v1334 = vpop.f32.mrb[0].mxu0
        %v1335 = vpop.f32.mrb[0].mxu0
        %v1336 = vpop.f32.mrb[0].mxu0
        %1337 = vdwg.mxu0
        %v1338 = vadd.f32 %v1287, %v1333
        %s1339 = scalar_lea.vmem %s5, 28
        %v1340 = vld [vmem:[%s1339] sm:$0xf]
        %1341 = vrot.lane.b32.xlu0 %v987, 109
        %v1342 = vpop.permute.xlu0 %1341
        %v1344 = vsel %vm990, %v1340, 0
        %v1347 = vsel %vm994, %v1342, 0
        %1349 = vmatprep.subr.bf16.mxu0 0
        %1350 = vmatpush1.bf16.msra.mxu0 %v1347
        %1351 = vmatprep.subr.bf16.mxu0 0
        %1352 = vmatpush1.bf16.msra.mxu0 0
        %1353 = vmatprep.subr.bf16.mxu0 0
        %1354 = vmatpush1.bf16.msra.mxu0 0
        %1355 = vmatprep.subr.bf16.mxu0 0
        %1356 = vmatpush1.bf16.msra.mxu0 0
        %1357 = vmatprep.subr.bf16.mxu0 0
        %1358 = vmatpush1.bf16.msra.mxu0 0
        %1359 = vmatprep.subr.bf16.mxu0 0
        %1360 = vmatpush1.bf16.msra.mxu0 0
        %1361 = vmatprep.subr.bf16.mxu0 0
        %1362 = vmatpush1.bf16.msra.mxu0 0
        %1363 = vmatprep.subr.bf16.mxu0 0
        %1364 = vmatpush1.bf16.msra.mxu0 0
        %1365 = vmatprep.subr.bf16.mxu0 0
        %1366 = vmatpush1.bf16.msra.mxu0 0
        %1367 = vmatprep.subr.bf16.mxu0 0
        %1368 = vmatpush1.bf16.msra.mxu0 0
        %1369 = vmatprep.subr.bf16.mxu0 0
        %1370 = vmatpush1.bf16.msra.mxu0 0
        %1371 = vmatprep.subr.bf16.mxu0 0
        %1372 = vmatpush1.bf16.msra.mxu0 0
        %1373 = vmatprep.subr.bf16.mxu0 0
        %1374 = vmatpush1.bf16.msra.mxu0 0
        %1375 = vmatprep.subr.bf16.mxu0 0
        %1376 = vmatpush1.bf16.msra.mxu0 0
        %1377 = vmatprep.subr.bf16.mxu0 0
        %1378 = vmatpush1.bf16.msra.mxu0 0
        %1379 = vmatprep.subr.bf16.mxu0 0
        %1380 = vmatpush1.bf16.msra.mxu0 0
        %1381 = vmatprep.mubr.bf16.mxu0 0
        %1382 = vmatmul.mubr.bf16.gmra.mrb[0].mxu0 %v1344
        %v1383 = vpop.f32.mrb[0].mxu0
        %v1384 = vadd.f32 0.0, %v1383
        %v1385 = vpop.f32.mrb[0].mxu0
        %v1386 = vpop.f32.mrb[0].mxu0
        %v1387 = vpop.f32.mrb[0].mxu0
        %1388 = vdwg.mxu0
        %v1389 = vadd.f32 %v1338, %v1384
        %s1390 = scalar_lea.vmem %s5, 32
        %v1391 = vld [vmem:[%s1390] sm:$0xf]
        %1392 = vrot.lane.b32.xlu0 %v987, 108
        %v1393 = vpop.permute.xlu0 %1392
        %v1395 = vsel %vm990, %v1391, 0
        %v1398 = vsel %vm994, %v1393, 0
        %1400 = vmatprep.subr.bf16.mxu0 0
        %1401 = vmatpush1.bf16.msra.mxu0 %v1398
        %1402 = vmatprep.subr.bf16.mxu0 0
        %1403 = vmatpush1.bf16.msra.mxu0 0
        %1404 = vmatprep.subr.bf16.mxu0 0
        %1405 = vmatpush1.bf16.msra.mxu0 0
        %1406 = vmatprep.subr.bf16.mxu0 0
        %1407 = vmatpush1.bf16.msra.mxu0 0
        %1408 = vmatprep.subr.bf16.mxu0 0
        %1409 = vmatpush1.bf16.msra.mxu0 0
        %1410 = vmatprep.subr.bf16.mxu0 0
        %1411 = vmatpush1.bf16.msra.mxu0 0
        %1412 = vmatprep.subr.bf16.mxu0 0
        %1413 = vmatpush1.bf16.msra.mxu0 0
        %1414 = vmatprep.subr.bf16.mxu0 0
        %1415 = vmatpush1.bf16.msra.mxu0 0
        %1416 = vmatprep.subr.bf16.mxu0 0
        %1417 = vmatpush1.bf16.msra.mxu0 0
        %1418 = vmatprep.subr.bf16.mxu0 0
        %1419 = vmatpush1.bf16.msra.mxu0 0
        %1420 = vmatprep.subr.bf16.mxu0 0
        %1421 = vmatpush1.bf16.msra.mxu0 0
        %1422 = vmatprep.subr.bf16.mxu0 0
        %1423 = vmatpush1.bf16.msra.mxu0 0
        %1424 = vmatprep.subr.bf16.mxu0 0
        %1425 = vmatpush1.bf16.msra.mxu0 0
        %1426 = vmatprep.subr.bf16.mxu0 0
        %1427 = vmatpush1.bf16.msra.mxu0 0
        %1428 = vmatprep.subr.bf16.mxu0 0
        %1429 = vmatpush1.bf16.msra.mxu0 0
        %1430 = vmatprep.subr.bf16.mxu0 0
        %1431 = vmatpush1.bf16.msra.mxu0 0
        %1432 = vmatprep.mubr.bf16.mxu0 0
        %1433 = vmatmul.mubr.bf16.gmra.mrb[0].mxu0 %v1395
        %v1434 = vpop.f32.mrb[0].mxu0
        %v1435 = vadd.f32 0.0, %v1434
        %v1436 = vpop.f32.mrb[0].mxu0
        %v1437 = vpop.f32.mrb[0].mxu0
        %v1438 = vpop.f32.mrb[0].mxu0
        %1439 = vdwg.mxu0
        %v1440 = vadd.f32 %v1389, %v1435
        %v1441 = vld [vmem:[%s6] sm:$0xff]
        %1443 = vset.pattern.permute.xlu0 0
        %1444 = vperm.xlu0 %1443, %v1441
        %v1445 = vpop.permute.xlu0 %1444
        %v1447 = vadd.f32 %v1440, %v1445
        %v1448 = vmax.f32 %v1447, 0.0
        %v1449 = vld [vmem:[%s7] sm:$0xff]
        %1451 = vset.pattern.permute.xlu0 0
        %1452 = vperm.xlu0 %1451, %v1449
        %v1453 = vpop.permute.xlu0 %1452
        %v1455 = vmul.f32 %v1448, %v1453
        %v1456 = vld [vmem:[%s8] sm:$0xff]
        %1458 = vset.pattern.permute.xlu0 0
        %1459 = vperm.xlu0 %1458, %v1456
        %v1460 = vpop.permute.xlu0 %1459
        %v1462 = vadd.f32 %v1455, %v1460
        %v1463 = vld [vmem:[%s382] sm:$0x3]
        %v1464 = vld [vmem:[%s9] sm:$0xf]
        %v1467 = vunpack.c.l.s4 1983009808
        %v1468 = vunpack.c.0.s8 %v1467
        %v1469 = vlaneseq
        %v1470 = vshrl.u32 %v1469, 7
        %v1471 = vsub.s32 %v1468, %v1470
        %v1472 = vrot.slane %v1463, %v1471
        %1473 = vrot.lane.b32.xlu0 %v1472, 109
        %v1474 = vpop.permute.xlu0 %1473
        %v1476 = vsel %vm398, %v1464, 0
        %v1479 = vsel %vm402, %v1474, 0
        %1481 = vmatprep.subr.bf16.mxu0 0
        %1482 = vmatpush1.bf16.msra.mxu0 %v1479
        %1483 = vmatprep.subr.bf16.mxu0 0
        %1484 = vmatpush1.bf16.msra.mxu0 0
        %1485 = vmatprep.subr.bf16.mxu0 0
        %1486 = vmatpush1.bf16.msra.mxu0 0
        %1487 = vmatprep.subr.bf16.mxu0 0
        %1488 = vmatpush1.bf16.msra.mxu0 0
        %1489 = vmatprep.subr.bf16.mxu0 0
        %1490 = vmatpush1.bf16.msra.mxu0 0
        %1491 = vmatprep.subr.bf16.mxu0 0
        %1492 = vmatpush1.bf16.msra.mxu0 0
        %1493 = vmatprep.subr.bf16.mxu0 0
        %1494 = vmatpush1.bf16.msra.mxu0 0
        %1495 = vmatprep.subr.bf16.mxu0 0
        %1496 = vmatpush1.bf16.msra.mxu0 0
        %1497 = vmatprep.subr.bf16.mxu0 0
        %1498 = vmatpush1.bf16.msra.mxu0 0
        %1499 = vmatprep.subr.bf16.mxu0 0
        %1500 = vmatpush1.bf16.msra.mxu0 0
        %1501 = vmatprep.subr.bf16.mxu0 0
        %1502 = vmatpush1.bf16.msra.mxu0 0
        %1503 = vmatprep.subr.bf16.mxu0 0
        %1504 = vmatpush1.bf16.msra.mxu0 0
        %1505 = vmatprep.subr.bf16.mxu0 0
        %1506 = vmatpush1.bf16.msra.mxu0 0
        %1507 = vmatprep.subr.bf16.mxu0 0
        %1508 = vmatpush1.bf16.msra.mxu0 0
        %1509 = vmatprep.subr.bf16.mxu0 0
        %1510 = vmatpush1.bf16.msra.mxu0 0
        %1511 = vmatprep.subr.bf16.mxu0 0
        %1512 = vmatpush1.bf16.msra.mxu0 0
        %1513 = vmatprep.mubr.bf16.mxu0 0
        %1514 = vmatmul.mubr.bf16.gmra.mrb[0].mxu0 %v1476
        %v1515 = vpop.f32.mrb[0].mxu0
        %v1516 = vadd.f32 0.0, %v1515
        %v1517 = vpop.f32.mrb[0].mxu0
        %v1518 = vpop.f32.mrb[0].mxu0
        %v1519 = vpop.f32.mrb[0].mxu0
        %1520 = vdwg.mxu0
        %v1521 = vadd.f32 %v1462, %v1516
        %vm1522 = vcmask 293888
        %1523 = vst.msk [vmem:[%s374] sm:$0xff] %vm1522, %v1521
        %s1524 = sand.u32 %s263, 1
        %s1525 = scalar_lea.sflag [#allocation4], %s1524
        %s1526 = sand.u32 %s263, 1
        %s1527 = smul.addr %s1526, 8
        %s1528 = scalar_lea.vmem [#allocation3], %s1527
        // Predicated region
        $region69: #{tpu_custom_call.1} parent=59 // pred_check
          %p1529 = pneg %p273
        $region70: #{tpu_custom_call.1} parent=59 // pred_check_branch
          %1531 = sbr.rel (%p1529) target = $region72
        $region71: #{tpu_custom_call.1} parent=59 // pred_region
          %s1533 = ssub.s32 128, 128
          %1534 = vsyncadd %s1525, %s1533
          %s1535 = smul.addr %s28, 2
          %s1536 = sadd.s32 %s29, %s1535
          %s1537 = smul.addr %s1536, 128
          %s1538 = scalar_lea.hbm %s10, %s1537
          %s1540 = sshll.u32 %s1528, 4
          %s1541 = int_to_ptr.vmem [resolvable:$true] %s1540
          %1543 = dma.vmem_to_hbm [thread:$0]  %s1541, 128, %s1538, %s1525
        $region72: #{tpu_custom_call.1} parent=59 // pred_fallthru
          _
      $region60: #{tpu_custom_call.1} parent=5 // pred_fallthru
        _
      %p1544 = scmp.le.s32.totalorder 2, %s19
      // Predicated region
      $region73: #{tpu_custom_call.1} parent=5 // pred_check
        %p1545 = pneg %p1544
      $region74: #{tpu_custom_call.1} parent=5 // pred_check_branch
        %1547 = sbr.rel (%p1545) target = $region76
      $region75: #{tpu_custom_call.1} parent=5 // pred_region
        %s1548 = ssub.s32 %s19, 2
        // Predicated region
        $region77: #{tpu_custom_call.1} parent=75 // pred_check
          %p1549 = pneg %p279
        $region78: #{tpu_custom_call.1} parent=75 // pred_check_branch
          %1551 = sbr.rel (%p1549) target = $region80
        $region79: #{tpu_custom_call.1} parent=75 // pred_region
          %s1552 = sand.u32 %s264, 1
          %s1553 = scalar_lea.sflag [#allocation4], %s1552
          %s1554 = sand.u32 %s264, 1
          %s1555 = smul.addr %s1554, 8
          %s1556 = scalar_lea.vmem [#allocation3], %s1555
          %1557 = dma.done %s1553, 128
        $region80: #{tpu_custom_call.1} parent=75 // pred_fallthru
          _
      $region76: #{tpu_custom_call.1} parent=5 // pred_fallthru
        _
    $region6: #{tpu_custom_call.1} parent=1 // loop_footer
      %s23 = sadd.s32 1, %s19
    $region7: #{tpu_custom_call.1} parent=1 // loop_footer_branch
      %18 = sbr.rel target = $region3
    $region8: #{tpu_custom_call.1} parent=1 // loop_exit
      _
    %1558 = vsyncpa [#allocation4], 1
    %s1559 = scalar_lea.sflag [#allocation4], 1
    %1560 = vsyncpa %s1559, 1

</llo_original>
